<compile_context>
chip_gen: v7x
topology: tpu7x:2x2x1
jax: 0.10.0
libtpu: 0.0.40
codegen_flags: <defaults>
</compile_context>

<pallas_src>
import jax
import jax.numpy as jnp
from jax import lax
from jax.experimental import pallas as pl
from jax.experimental.pallas import tpu as pltpu


def _round_up(x, m):
    return (x + m - 1) // m * m


# ---------------------------------------------------------------------------
# Pallas tiled matmul (bf16 operands, f32 accumulation)
#   - single-K-block path: no K grid axis, no accumulator scratch
#   - K-tiled path: accumulator scratch + init/finalize via pl.when
# ---------------------------------------------------------------------------
def _matmul_kernel_single_k(a_ref, b_ref, o_ref):
    o_ref[...] = jnp.dot(a_ref[...], b_ref[...],
                         preferred_element_type=jnp.float32).astype(o_ref.dtype)


def _matmul_kernel_acc(a_ref, b_ref, o_ref, acc_ref):
    @pl.when(pl.program_id(2) == 0)
    def _():
        acc_ref[...] = jnp.zeros_like(acc_ref)

    acc_ref[...] += jnp.dot(a_ref[...], b_ref[...],
                            preferred_element_type=jnp.float32)

    @pl.when(pl.program_id(2) == pl.num_programs(2) - 1)
    def _():
        o_ref[...] = acc_ref[...].astype(o_ref.dtype)


def pallas_matmul(a, b, *, out_dtype=jnp.float32, tm=None, tn=None,
                  max_single_k=2048, tk=512):
    M, K = a.shape
    K2, N = b.shape
    assert K == K2
    # bf16 operands -> MXU-native rate + halved HBM traffic; accumulation stays f32.
    a = a.astype(jnp.bfloat16)
    b = b.astype(jnp.bfloat16)

    tm = tm if tm is not None else min(256, _round_up(M, 8))
    tn = tn if tn is not None else min(512, _round_up(N, 128))
    Mp = _round_up(M, tm)
    Np = _round_up(N, tn)
    if Mp != M:                       # pad only the small M remainder
        a = jnp.pad(a, ((0, Mp - M), (0, 0)))
    if Np != N:
        b = jnp.pad(b, ((0, 0), (0, Np - N)))

    if K <= max_single_k:
        # full-K block: K grid axis collapsed, no accumulator scratch / init / writeback
        out = pl.pallas_call(
            _matmul_kernel_single_k,
            out_shape=jax.ShapeDtypeStruct((Mp, Np), out_dtype),
            grid=(Mp // tm, Np // tn),
            in_specs=[pl.BlockSpec((tm, K), lambda i, j: (i, 0)),
                      pl.BlockSpec((K, tn), lambda i, j: (0, j))],
            out_specs=pl.BlockSpec((tm, tn), lambda i, j: (i, j)),
            compiler_params=pltpu.CompilerParams(
                dimension_semantics=("parallel", "parallel")),
        )(a, b)
    else:
        Kp = _round_up(K, tk)
        if Kp != K:
            a = jnp.pad(a, ((0, 0), (0, Kp - K)))
            b = jnp.pad(b, ((0, Kp - K), (0, 0)))
        out = pl.pallas_call(
            _matmul_kernel_acc,
            out_shape=jax.ShapeDtypeStruct((Mp, Np), out_dtype),
            grid=(Mp // tm, Np // tn, Kp // tk),
            in_specs=[pl.BlockSpec((tm, tk), lambda i, j, k: (i, k)),
                      pl.BlockSpec((tk, tn), lambda i, j, k: (k, j))],
            out_specs=pl.BlockSpec((tm, tn), lambda i, j, k: (i, j)),
            scratch_shapes=[pltpu.VMEM((tm, tn), jnp.float32)],
            compiler_params=pltpu.CompilerParams(
                dimension_semantics=("parallel", "parallel", "arbitrary")),
        )(a, b)

    if Mp != M or Np != N:
        out = out[:M, :N]
    return out


# ---------------------------------------------------------------------------
# ConvTranspose3d = Pallas channel-contraction matmul + shift-add col2im
# ---------------------------------------------------------------------------
def _fold_axis(x, spatial_axis, kernel_axis, stride, l_out):
    """Fold (L_in @ spatial_axis, K @ kernel_axis) into L_out @ spatial_axis:
       out[..., d*stride + k, ...] += x[..., d, ..., k, ...]   (f32 accumulation)."""
    l_in = x.shape[spatial_axis]
    ksz = x.shape[kernel_axis]
    dil_len = (l_in - 1) * stride + 1
    acc = None
    for k in range(ksz):
        piece = lax.index_in_dim(x, k, axis=kernel_axis, keepdims=False)
        cfg = [(0, 0, 0)] * piece.ndim
        cfg[spatial_axis] = (k, l_out - k - dil_len, stride - 1)  # lo, hi, interior
        piece = lax.pad(piece.astype(jnp.float32), jnp.array(0.0, jnp.float32), cfg)
        acc = piece if acc is None else acc + piece
    return acc


def conv_transpose3d(x, w, b, stride):
    # x: (N, Di, Hi, Wi, Cin) channel-last; w: (Cin, Cout, Kd, Kh, Kw) (PyTorch); b: (Cout,)
    N, Di, Hi, Wi, Cin = x.shape
    _, Cout, Kd, Kh, Kw = w.shape
    sd, sh, sw = stride
    Do, Ho, Wo = (Di - 1) * sd + Kd, (Hi - 1) * sh + Kh, (Wi - 1) * sw + Kw

    bmat = jnp.transpose(w, (0, 2, 3, 4, 1)).reshape(Cin, Kd * Kh * Kw * Cout)
    a = x.reshape(N * Di * Hi * Wi, Cin)          # free reshape (channel-last)
    cols = pallas_matmul(a, bmat, out_dtype=jnp.bfloat16)
    cols = cols.reshape(N, Di, Hi, Wi, Kd, Kh, Kw, Cout)

    # col2im scatter-add as static dilated shift-adds, accumulated in f32
    y = _fold_axis(cols, 1, 4, sd, Do)            # (N, Do, Hi, Wi, Kh, Kw, C)
    y = _fold_axis(y,    2, 4, sh, Ho)            # (N, Do, Ho, Wi, Kw, C)
    y = _fold_axis(y,    3, 4, sw, Wo)            # (N, Do, Ho, Wo, C)
    return y + b                                   # bias in f32, channel-last


# ---------------------------------------------------------------------------
# Pallas fused ReLU + AvgPool3d(2,2) core (lane axis = W*C, lane-dense output)
# ---------------------------------------------------------------------------
def _relu_pool_dh_kernel(x_ref, o_ref):
    # x_ref: (1, 2, Ho, 2, W*C)  -- (d-pair, Ho, h-pair, lanes)
    s = jnp.maximum(x_ref[0, 0, :, 0, :], 0.0)
    s = s + jnp.maximum(x_ref[0, 0, :, 1, :], 0.0)
    s = s + jnp.maximum(x_ref[0, 1, :, 0, :], 0.0)
    s = s + jnp.maximum(x_ref[0, 1, :, 1, :], 0.0)
    o_ref[0, 0, :, :] = s * 0.125                 # 1/8 for the full 2x2x2 window


def pallas_relu_avgpool_222(x):
    # x: (N, D, H, W, C) f32 -> mean(relu(x)) over 2x2x2 windows: (N, D//2, H//2, W//2, C)
    N, D, H, W, C = x.shape
    Do, Ho, Wo = D // 2, H // 2, W // 2
    WC = W * C
    xr = x[:, :, :2 * Ho].reshape(N, D, Ho, 2, WC)    # free reshape (contiguous split/merge)
    y = pl.pallas_call(
        _relu_pool_dh_kernel,
        out_shape=jax.ShapeDtypeStruct((N, Do, Ho, WC), jnp.float32),
        grid=(N, Do),
        in_specs=[pl.BlockSpec((1, 2, Ho, 2, WC), lambda n, d: (n, d, 0, 0, 0))],
        out_specs=pl.BlockSpec((1, 1, Ho, WC), lambda n, d: (n, d, 0, 0)),
        compiler_params=pltpu.CompilerParams(
            dimension_semantics=("parallel", "parallel")),
    )(xr)
    # remaining 2-wide W-pair add on the already 4x-reduced tensor (tiny, lane groups of C)
    y = y.reshape(N, Do, Ho, W, C)
    return y[:, :, :, 0:2 * Wo:2, :] + y[:, :, :, 1:2 * Wo:2, :]


# ---------------------------------------------------------------------------
# Model forward
# ---------------------------------------------------------------------------
def model_forward(x, params):
    w1, b1, w2, b2, fc_w, fc_b = params

    x = jnp.transpose(x, (0, 2, 3, 4, 1))          # NCDHW -> NDHWC once, then stay channel-last
    x1 = conv_transpose3d(x, w1, b1, (2, 2, 2))    # f32
    x1 = jnp.maximum(x1, 0.0)                      # ReLU in f32 (before bf16 cast in matmul)
    x3 = conv_transpose3d(x1, w2, b2, (1, 2, 2))   # f32

    pooled = pallas_relu_avgpool_222(x3)           # (N, D3, H3, W3, C) f32
    feats = pooled.reshape(pooled.shape[0], -1)    # flatten order (d, h, w, c)

    # final Linear: same Pallas matmul, tiny tiles + K-tiled accumulation
    return pallas_matmul(feats, fc_w, out_dtype=jnp.float32, tm=8, tn=128) + fc_b[None, :]


if __name__ == "__main__":
    # Small instantiation (file uses input_size=512, num_channels=56; scaled down here).
    input_size = 32
    num_channels = 16
    num_classes = 5
    N, Din, Hin, Win = 2, 2, 2, 2

    # shape propagation (for the fc input size)
    D1, H1, W1 = (Din - 1) * 2 + 8, (Hin - 1) * 2 + 9, (Win - 1) * 2 + 4
    D2, H2, W2 = (D1 - 1) * 1 + 8, (H1 - 1) * 2 + 10, (W1 - 1) * 2 + 6
    D3, H3, W3 = D2 // 2, H2 // 2, W2 // 2
    flat_features = num_channels * D3 * H3 * W3
    # TODO(synk): the reference nn.Linear(num_channels, num_classes) is shape-incompatible
    # with Flatten's output (C*D*H*W features); the fc here is sized to the actual
    # flattened feature count (flatten order is (d,h,w,c) in this channel-last pipeline).

    key = jax.random.PRNGKey(0)
    ks = jax.random.split(key, 7)
    w1 = jax.random.normal(ks[0], (input_size, num_channels, 8, 9, 4), jnp.float32) * 0.05
    b1 = jax.random.normal(ks[1], (num_channels,), jnp.float32) * 0.05
    w2 = jax.random.normal(ks[2], (num_channels, num_channels, 8, 10, 6), jnp.float32) * 0.05
    b2 = jax.random.normal(ks[3], (num_channels,), jnp.float32) * 0.05
    fc_w = jax.random.normal(ks[4], (flat_features, num_classes), jnp.float32) * 0.01
    fc_b = jax.random.normal(ks[5], (num_classes,), jnp.float32) * 0.01
    x = jax.random.normal(ks[6], (N, input_size, Din, Hin, Win), jnp.float32)

    params = (w1, b1, w2, b2, fc_w, fc_b)
    out = jax.jit(model_forward)(x, params)
    out = jax.block_until_ready(out)
    assert out.shape == (N, num_classes), out.shape
    print("KERNEL_OK")
</pallas_src>

<mosaic_0001>
module attributes {stable_mosaic.version = 11 : i64} {
  func.func @_matmul_kernel_single_k(%arg0: i32, %arg1: i32, %arg2: memref<16x32xbf16, #tpu.memory_space<vmem>>, %arg3: memref<32x512xbf16, #tpu.memory_space<vmem>>, %arg4: memref<16x512xbf16, #tpu.memory_space<vmem>>) attributes {dimension_semantics = [#tpu.dimension_semantics<parallel>, #tpu.dimension_semantics<parallel>], iteration_bounds = array<i64: 1, 9>, scalar_prefetch = 0 : i64, scratch_operands = 0 : i64, tpu.core_type = #tpu.core_type<tc>, window_params = [{transform_indices = @transform_0, window_bounds = array<i64: 16, 32>}, {transform_indices = @transform_1, window_bounds = array<i64: 32, 512>}, {transform_indices = @transform_2, window_bounds = array<i64: 16, 512>}]} {
    %c0 = arith.constant 0 : index
    %c0_0 = arith.constant 0 : index
    %0 = vector.load %arg2[%c0, %c0_0] : memref<16x32xbf16, #tpu.memory_space<vmem>>, vector<16x32xbf16>
    %c0_1 = arith.constant 0 : index
    %c0_2 = arith.constant 0 : index
    %1 = vector.load %arg3[%c0_1, %c0_2] : memref<32x512xbf16, #tpu.memory_space<vmem>>, vector<32x512xbf16>
    %cst = arith.constant dense<0.000000e+00> : vector<16x512xf32>
    %2 = tpu.matmul %0, %1, %cst {dimension_numbers = #tpu.dot_dimension_numbers<[1], [0], [0], [1], [0, 0, 1, 1], [], []>} : vector<16x32xbf16>, vector<32x512xbf16>, vector<16x512xf32> -> vector<16x512xf32>
    %3 = arith.truncf %2 : vector<16x512xf32> to vector<16x512xbf16>
    %c0_3 = arith.constant 0 : index
    %c0_4 = arith.constant 0 : index
    %4 = vector.load %arg4[%c0_3, %c0_4] : memref<16x512xbf16, #tpu.memory_space<vmem>>, vector<16x512xbf16>
    tpu.vector_store %arg4[%c0_3, %c0_4], %3 {strides = array<i32>} : memref<16x512xbf16, #tpu.memory_space<vmem>>, vector<16x512xbf16>,
    return
  }
  func.func @transform_0(%arg0: i32, %arg1: i32) -> (i32, i32) {
    %c0_i32 = arith.constant 0 : i32
    %c0_i32_0 = arith.constant 0 : i32
    return %arg0, %c0_i32 : i32, i32
  }
  func.func @transform_1(%arg0: i32, %arg1: i32) -> (i32, i32) {
    %c0_i32 = arith.constant 0 : i32
    %c0_i32_0 = arith.constant 0 : i32
    return %c0_i32, %arg1 : i32, i32
  }
  func.func @transform_2(%arg0: i32, %arg1: i32) -> (i32, i32) {
    %c0_i32 = arith.constant 0 : i32
    return %arg0, %arg1 : i32, i32
  }
}

module attributes {stable_mosaic.version = 11 : i64} {
  func.func @_matmul_kernel_single_k(%arg0: i32, %arg1: i32, %arg2: memref<256x16xbf16, #tpu.memory_space<vmem>>, %arg3: memref<16x512xbf16, #tpu.memory_space<vmem>>, %arg4: memref<256x512xbf16, #tpu.memory_space<vmem>>) attributes {dimension_semantics = [#tpu.dimension_semantics<parallel>, #tpu.dimension_semantics<parallel>], iteration_bounds = array<i64: 6, 15>, scalar_prefetch = 0 : i64, scratch_operands = 0 : i64, tpu.core_type = #tpu.core_type<tc>, window_params = [{transform_indices = @transform_0, window_bounds = array<i64: 256, 16>}, {transform_indices = @transform_1, window_bounds = array<i64: 16, 512>}, {transform_indices = @transform_2, window_bounds = array<i64: 256, 512>}]} {
    %c0 = arith.constant 0 : index
    %c0_0 = arith.constant 0 : index
    %0 = vector.load %arg2[%c0, %c0_0] : memref<256x16xbf16, #tpu.memory_space<vmem>>, vector<256x16xbf16>
    %c0_1 = arith.constant 0 : index
    %c0_2 = arith.constant 0 : index
    %1 = vector.load %arg3[%c0_1, %c0_2] : memref<16x512xbf16, #tpu.memory_space<vmem>>, vector<16x512xbf16>
    %cst = arith.constant dense<0.000000e+00> : vector<256x512xf32>
    %2 = tpu.matmul %0, %1, %cst {dimension_numbers = #tpu.dot_dimension_numbers<[1], [0], [0], [1], [0, 0, 1, 1], [], []>} : vector<256x16xbf16>, vector<16x512xbf16>, vector<256x512xf32> -> vector<256x512xf32>
    %3 = arith.truncf %2 : vector<256x512xf32> to vector<256x512xbf16>
    %c0_3 = arith.constant 0 : index
    %c0_4 = arith.constant 0 : index
    %4 = vector.load %arg4[%c0_3, %c0_4] : memref<256x512xbf16, #tpu.memory_space<vmem>>, vector<256x512xbf16>
    tpu.vector_store %arg4[%c0_3, %c0_4], %3 {strides = array<i32>} : memref<256x512xbf16, #tpu.memory_space<vmem>>, vector<256x512xbf16>,
    return
  }
  func.func @transform_0(%arg0: i32, %arg1: i32) -> (i32, i32) {
    %c0_i32 = arith.constant 0 : i32
    %c0_i32_0 = arith.constant 0 : i32
    return %arg0, %c0_i32 : i32, i32
  }
  func.func @transform_1(%arg0: i32, %arg1: i32) -> (i32, i32) {
    %c0_i32 = arith.constant 0 : i32
    %c0_i32_0 = arith.constant 0 : i32
    return %c0_i32, %arg1 : i32, i32
  }
  func.func @transform_2(%arg0: i32, %arg1: i32) -> (i32, i32) {
    %c0_i32 = arith.constant 0 : i32
    return %arg0, %arg1 : i32, i32
  }
}

module attributes {stable_mosaic.version = 11 : i64} {
  func.func @_relu_pool_dh_kernel(%arg0: i32, %arg1: i32, %arg2: memref<1x2x15x2x256xf32, #tpu.memory_space<vmem>>, %arg3: memref<1x1x15x256xf32, #tpu.memory_space<vmem>>) attributes {dimension_semantics = [#tpu.dimension_semantics<parallel>, #tpu.dimension_semantics<parallel>], iteration_bounds = array<i64: 2, 8>, scalar_prefetch = 0 : i64, scratch_operands = 0 : i64, tpu.core_type = #tpu.core_type<tc>, window_params = [{transform_indices = @transform_0, window_bounds = array<i64: 1, 2, 15, 2, 256>}, {transform_indices = @transform_1, window_bounds = array<i64: 1, 1, 15, 256>}]} {
    %c0 = arith.constant 0 : index
    %c0_0 = arith.constant 0 : index
    %c0_1 = arith.constant 0 : index
    %c0_2 = arith.constant 0 : index
    %c0_3 = arith.constant 0 : index
    %0 = vector.load %arg2[%c0, %c0_0, %c0_1, %c0_2, %c0_3] : memref<1x2x15x2x256xf32, #tpu.memory_space<vmem>>, vector<1x1x15x1x256xf32>
    %1 = vector.shape_cast %0 : vector<1x1x15x1x256xf32> to vector<15x256xf32>
    %cst = arith.constant 0.000000e+00 : f32
    %2 = vector.broadcast %cst : f32 to vector<15x256xf32>
    %3 = arith.maximumf %1, %2 : vector<15x256xf32>
    %c0_4 = arith.constant 0 : index
    %c0_5 = arith.constant 0 : index
    %c0_6 = arith.constant 0 : index
    %c1 = arith.constant 1 : index
    %c0_7 = arith.constant 0 : index
    %4 = vector.load %arg2[%c0_4, %c0_5, %c0_6, %c1, %c0_7] : memref<1x2x15x2x256xf32, #tpu.memory_space<vmem>>, vector<1x1x15x1x256xf32>
    %5 = vector.shape_cast %4 : vector<1x1x15x1x256xf32> to vector<15x256xf32>
    %cst_8 = arith.constant 0.000000e+00 : f32
    %6 = vector.broadcast %cst_8 : f32 to vector<15x256xf32>
    %7 = arith.maximumf %5, %6 : vector<15x256xf32>
    %8 = arith.addf %3, %7 : vector<15x256xf32>
    %c0_9 = arith.constant 0 : index
    %c1_10 = arith.constant 1 : index
    %c0_11 = arith.constant 0 : index
    %c0_12 = arith.constant 0 : index
    %c0_13 = arith.constant 0 : index
    %9 = vector.load %arg2[%c0_9, %c1_10, %c0_11, %c0_12, %c0_13] : memref<1x2x15x2x256xf32, #tpu.memory_space<vmem>>, vector<1x1x15x1x256xf32>
    %10 = vector.shape_cast %9 : vector<1x1x15x1x256xf32> to vector<15x256xf32>
    %cst_14 = arith.constant 0.000000e+00 : f32
    %11 = vector.broadcast %cst_14 : f32 to vector<15x256xf32>
    %12 = arith.maximumf %10, %11 : vector<15x256xf32>
    %13 = arith.addf %8, %12 : vector<15x256xf32>
    %c0_15 = arith.constant 0 : index
    %c1_16 = arith.constant 1 : index
    %c0_17 = arith.constant 0 : index
    %c1_18 = arith.constant 1 : index
    %c0_19 = arith.constant 0 : index
    %14 = vector.load %arg2[%c0_15, %c1_16, %c0_17, %c1_18, %c0_19] : memref<1x2x15x2x256xf32, #tpu.memory_space<vmem>>, vector<1x1x15x1x256xf32>
    %15 = vector.shape_cast %14 : vector<1x1x15x1x256xf32> to vector<15x256xf32>
    %cst_20 = arith.constant 0.000000e+00 : f32
    %16 = vector.broadcast %cst_20 : f32 to vector<15x256xf32>
    %17 = arith.maximumf %15, %16 : vector<15x256xf32>
    %18 = arith.addf %13, %17 : vector<15x256xf32>
    %cst_21 = arith.constant 1.250000e-01 : f32
    %19 = vector.broadcast %cst_21 : f32 to vector<15x256xf32>
    %20 = arith.mulf %18, %19 : vector<15x256xf32>
    %c0_22 = arith.constant 0 : index
    %c0_23 = arith.constant 0 : index
    %c0_24 = arith.constant 0 : index
    %c0_25 = arith.constant 0 : index
    %21 = vector.load %arg3[%c0_22, %c0_23, %c0_24, %c0_25] : memref<1x1x15x256xf32, #tpu.memory_space<vmem>>, vector<1x1x15x256xf32>
    %22 = vector.shape_cast %21 : vector<1x1x15x256xf32> to vector<15x256xf32>
    %23 = vector.shape_cast %20 : vector<15x256xf32> to vector<1x1x15x256xf32>
    tpu.vector_store %arg3[%c0_22, %c0_23, %c0_24, %c0_25], %23 {strides = array<i32>} : memref<1x1x15x256xf32, #tpu.memory_space<vmem>>, vector<1x1x15x256xf32>,
    return
  }
  func.func @transform_0(%arg0: i32, %arg1: i32) -> (i32, i32, i32, i32, i32) {
    %c0_i32 = arith.constant 0 : i32
    %c0_i32_0 = arith.constant 0 : i32
    %c0_i32_1 = arith.constant 0 : i32
    %c0_i32_2 = arith.constant 0 : i32
    return %arg0, %arg1, %c0_i32, %c0_i32_0, %c0_i32_1 : i32, i32, i32, i32, i32
  }
  func.func @transform_1(%arg0: i32, %arg1: i32) -> (i32, i32, i32, i32) {
    %c0_i32 = arith.constant 0 : i32
    %c0_i32_0 = arith.constant 0 : i32
    %c0_i32_1 = arith.constant 0 : i32
    return %arg0, %arg1, %c0_i32, %c0_i32_0 : i32, i32, i32, i32
  }
}

module attributes {stable_mosaic.version = 11 : i64} {
  func.func @_matmul_kernel_acc(%arg0: i32, %arg1: i32, %arg2: i32, %arg3: memref<8x512xbf16, #tpu.memory_space<vmem>>, %arg4: memref<512x128xbf16, #tpu.memory_space<vmem>>, %arg5: memref<8x128xf32, #tpu.memory_space<vmem>>, %arg6: memref<8x128xf32, #tpu.memory_space<vmem>>) attributes {dimension_semantics = [#tpu.dimension_semantics<parallel>, #tpu.dimension_semantics<parallel>, #tpu.dimension_semantics<arbitrary>], iteration_bounds = array<i64: 1, 1, 30>, scalar_prefetch = 0 : i64, scratch_operands = 1 : i64, tpu.core_type = #tpu.core_type<tc>, window_params = [{transform_indices = @transform_0, window_bounds = array<i64: 8, 512>}, {transform_indices = @transform_1, window_bounds = array<i64: 512, 128>}, {transform_indices = @transform_2, window_bounds = array<i64: 8, 128>}]} {
    %c0_i32 = arith.constant 0 : i32
    %0 = arith.cmpi eq, %arg2, %c0_i32 : i32
    %1 = arith.extui %0 : i1 to i32
    %c0_i32_0 = arith.constant 0 : i32
    %2 = arith.cmpi ne, %1, %c0_i32_0 : i32
    scf.if %2 {
      %cst_9 = arith.constant 0.000000e+00 : f32
      %12 = vector.broadcast %cst_9 : f32 to vector<8x128xf32>
      %c0_10 = arith.constant 0 : index
      %c0_11 = arith.constant 0 : index
      %13 = vector.load %arg6[%c0_10, %c0_11] : memref<8x128xf32, #tpu.memory_space<vmem>>, vector<8x128xf32>
      tpu.vector_store %arg6[%c0_10, %c0_11], %12 {strides = array<i32>} : memref<8x128xf32, #tpu.memory_space<vmem>>, vector<8x128xf32>,
    } else {
    }
    %c0 = arith.constant 0 : index
    %c0_1 = arith.constant 0 : index
    %3 = vector.load %arg6[%c0, %c0_1] : memref<8x128xf32, #tpu.memory_space<vmem>>, vector<8x128xf32>
    %c0_2 = arith.constant 0 : index
    %c0_3 = arith.constant 0 : index
    %4 = vector.load %arg3[%c0_2, %c0_3] : memref<8x512xbf16, #tpu.memory_space<vmem>>, vector<8x512xbf16>
    %c0_4 = arith.constant 0 : index
    %c0_5 = arith.constant 0 : index
    %5 = vector.load %arg4[%c0_4, %c0_5] : memref<512x128xbf16, #tpu.memory_space<vmem>>, vector<512x128xbf16>
    %cst = arith.constant dense<0.000000e+00> : vector<8x128xf32>
    %6 = tpu.matmul %4, %5, %cst {dimension_numbers = #tpu.dot_dimension_numbers<[1], [0], [0], [1], [0, 0, 1, 1], [], []>} : vector<8x512xbf16>, vector<512x128xbf16>, vector<8x128xf32> -> vector<8x128xf32>
    %7 = arith.addf %3, %6 : vector<8x128xf32>
    %c0_6 = arith.constant 0 : index
    %c0_7 = arith.constant 0 : index
    %8 = vector.load %arg6[%c0_6, %c0_7] : memref<8x128xf32, #tpu.memory_space<vmem>>, vector<8x128xf32>
    tpu.vector_store %arg6[%c0_6, %c0_7], %7 {strides = array<i32>} : memref<8x128xf32, #tpu.memory_space<vmem>>, vector<8x128xf32>,
    %c29_i32 = arith.constant 29 : i32
    %9 = arith.cmpi eq, %arg2, %c29_i32 : i32
    %10 = arith.extui %9 : i1 to i32
    %c0_i32_8 = arith.constant 0 : i32
    %11 = arith.cmpi ne, %10, %c0_i32_8 : i32
    scf.if %11 {
      %c0_9 = arith.constant 0 : index
      %c0_10 = arith.constant 0 : index
      %12 = vector.load %arg6[%c0_9, %c0_10] : memref<8x128xf32, #tpu.memory_space<vmem>>, vector<8x128xf32>
      %c0_11 = arith.constant 0 : index
      %c0_12 = arith.constant 0 : index
      %13 = vector.load %arg5[%c0_11, %c0_12] : memref<8x128xf32, #tpu.memory_space<vmem>>, vector<8x128xf32>
      tpu.vector_store %arg5[%c0_11, %c0_12], %12 {strides = array<i32>} : memref<8x128xf32, #tpu.memory_space<vmem>>, vector<8x128xf32>,
    } else {
    }
    return
  }
  func.func @transform_0(%arg0: i32, %arg1: i32, %arg2: i32) -> (i32, i32) {
    %c0_i32 = arith.constant 0 : i32
    return %arg0, %arg2 : i32, i32
  }
  func.func @transform_1(%arg0: i32, %arg1: i32, %arg2: i32) -> (i32, i32) {
    %c0_i32 = arith.constant 0 : i32
    return %arg2, %arg1 : i32, i32
  }
  func.func @transform_2(%arg0: i32, %arg1: i32, %arg2: i32) -> (i32, i32) {
    %c0_i32 = arith.constant 0 : i32
    return %arg0, %arg1 : i32, i32
  }
}

</mosaic_0001>

<llo_original>
// kernel: model_forward.4
$region0: #{model_forward.4}
  #allocation0 [shape = 'u32[]', space=smem, size = 0x4, offset = 0x4, fixed_abs, tag = 'smem constant byte address 0x4 - core index']
  #allocation1 [shape = 'u32[144,128]{1,0:T(1,128)}', space=vmem, size = 0x12000, scoped, tag = 'internal scratch']
  %s0 = inlined_call_operand.vmem [shape: bf16[16,32], index: 0, kind: input, shape index: {}]
  %s1 = inlined_call_operand.vmem [shape: bf16[32,4608], index: 1, kind: input, shape index: {}]
  %s2 = inlined_call_operand.vmem [shape: bf16[16,4608], index: 2, kind: output, shape index: {}]
  %s3 = sld [smem:[#allocation0]]
  $region83: #{model_forward.4} parent=0
    _
  %s5 = ssub.s32 1, %s3
  %s6 = scalar_select 0, %s5, %s3
  $region1: #{model_forward.4} parent=0
    #allocation2 [shape = 'u8[65536]{0}', space=vmem, size = 0x10000, scoped, tag = 'input window, operand 1']
    #allocation3 [shape = 'u8[32768]{0}', space=vmem, size = 0x8000, scoped, tag = 'output window, operand 0']
    loop: start=0, step=1, limit=11
    $region2: #{model_forward.4} parent=1 // loop_pre_header
      _
    $region3: #{model_forward.4} parent=1 // loop_header
      %s8 = sphi 0, %s12
      %p9 = scmp.ge.s32.totalorder %s8, 11
      %s15 = sphi 0, %s27
      %s16 = sphi 0, %s23
      %s17 = sphi 0, %s15
      %s18 = sphi 0, %s16
      %s19 = sphi 0, %s17
      %s20 = sphi 0, %s18
      %s30 = sphi 0, %s32
      %s33 = sphi 0, %s30
      %s34 = sphi 0, %s33
      %s50 = sphi 0, %s34
      %s56 = sphi 0, %s58
      %s59 = sphi 0, %s56
      %s60 = sphi 0, %s59
      %s76 = sphi 0, %s60
      %s84 = sphi 0, %s86
      %s87 = sphi 0, %s84
      %s88 = sphi 0, %s87
      %s104 = sphi 0, %s88
    $region4: #{model_forward.4} parent=1 // loop_header_branch
      %11 = sbr.rel (%p9) target = $region8
    $region5: #{model_forward.4} parent=1 // loop_body
      %s13 = ssub.s32 %s8, 1
      %s14 = ssub.s32 %s8, 2
      %s21 = sadd.s32 1, %s16
      %p22 = scmp.ge.s32.totalorder %s21, 9
      %s23 = scalar_select %p22, 0, %s21
      %s24 = sadd.s32 1, %s15
      %s25 = scalar_select %p22, %s24, %s15
      %p26 = scmp.ge.s32.totalorder %s25, 1
      %s27 = scalar_select %p26, 0, %s25
      %s28 = ssub.s32 %s15, %s27
      %p29 = scmp.eq.s32.totalorder %s28, 0
      %s31 = sadd.s32 %s30, 1
      %s32 = scalar_select %p29, %s30, %s31
      %p35 = pneg %p29
      %p36 = scmp.eq.s32.totalorder %s8, 8
      %p37 = por %p35, %p36
      %p38 = scmp.ne.s32.totalorder %s30, %s33
      %p39 = scmp.eq.s32.totalorder %s8, 0
      %p40 = por %p38, %p39
      %p41 = scmp.ne.s32.totalorder %s30, %s33
      %p42 = scmp.eq.s32.totalorder %s13, 8
      %p43 = por %p41, %p42
      %p44 = scmp.ne.s32.totalorder %s33, %s34
      %p45 = scmp.eq.s32.totalorder %s13, 0
      %p46 = por %p44, %p45
      %p47 = scmp.ne.s32.totalorder %s33, %s34
      %p48 = scmp.eq.s32.totalorder %s14, 8
      %p49 = por %p47, %p48
      %p51 = scmp.ne.s32.totalorder %s34, %s50
      %p52 = scmp.eq.s32.totalorder %s14, 0
      %p53 = por %p51, %p52
      %s54 = ssub.s32 %s16, %s23
      %p55 = scmp.eq.s32.totalorder %s54, 0
      %s57 = sadd.s32 %s56, 1
      %s58 = scalar_select %p55, %s56, %s57
      %p61 = pneg %p55
      %p62 = scmp.eq.s32.totalorder %s8, 8
      %p63 = por %p61, %p62
      %p64 = scmp.ne.s32.totalorder %s56, %s59
      %p65 = scmp.eq.s32.totalorder %s8, 0
      %p66 = por %p64, %p65
      %p67 = scmp.ne.s32.totalorder %s56, %s59
      %p68 = scmp.eq.s32.totalorder %s13, 8
      %p69 = por %p67, %p68
      %p70 = scmp.ne.s32.totalorder %s59, %s60
      %p71 = scmp.eq.s32.totalorder %s13, 0
      %p72 = por %p70, %p71
      %p73 = scmp.ne.s32.totalorder %s59, %s60
      %p74 = scmp.eq.s32.totalorder %s14, 8
      %p75 = por %p73, %p74
      %p77 = scmp.ne.s32.totalorder %s60, %s76
      %p78 = scmp.eq.s32.totalorder %s14, 0
      %p79 = por %p77, %p78
      %s80 = ssub.s32 %s15, %s27
      %s81 = ssub.s32 %s16, %s23
      %s82 = sor.u32 %s80, %s81
      %p83 = scmp.eq.s32.totalorder %s82, 0
      %s85 = sadd.s32 %s84, 1
      %s86 = scalar_select %p83, %s84, %s85
      %p89 = pneg %p83
      %p90 = scmp.eq.s32.totalorder %s8, 8
      %p91 = por %p89, %p90
      %p92 = scmp.ne.s32.totalorder %s84, %s87
      %p93 = scmp.eq.s32.totalorder %s8, 0
      %p94 = por %p92, %p93
      %p95 = scmp.ne.s32.totalorder %s84, %s87
      %p96 = scmp.eq.s32.totalorder %s13, 8
      %p97 = por %p95, %p96
      %p98 = scmp.ne.s32.totalorder %s87, %s88
      %p99 = scmp.eq.s32.totalorder %s13, 0
      %p100 = por %p98, %p99
      %p101 = scmp.ne.s32.totalorder %s87, %s88
      %p102 = scmp.eq.s32.totalorder %s14, 8
      %p103 = por %p101, %p102
      %p105 = scmp.ne.s32.totalorder %s88, %s104
      %p106 = scmp.eq.s32.totalorder %s14, 0
      %p107 = por %p105, %p106
      %p108 = scmp.le.s32.totalorder 1, %s8
      %p109 = scmp.lt.s32.totalorder %s8, 10
      %p110 = pnand %p108, %p109
      %p111 = pneg %p110
      // Predicated region
      $region9: #{model_forward.4} parent=5 // pred_check
        _
      $region10: #{model_forward.4} parent=5 // pred_check_branch
        %113 = sbr.rel (%p110) target = $region12
      $region11: #{model_forward.4} parent=5 // pred_region
        %s114 = ssub.s32 %s8, 1
        // Predicated region
        $region13: #{model_forward.4} parent=11 // pred_check
          %p115 = pneg %p46
        $region14: #{model_forward.4} parent=11 // pred_check_branch
          %117 = sbr.rel (%p115) target = $region16
        $region15: #{model_forward.4} parent=11 // pred_region
          %s118 = smul.u32 2, %s17
          %p119 = scmp.lt.s32.totalorder %s118, 1
          %s120 = scalar_select %p119, %s118, 1
          %s121 = smul.addr %s120, 4
          %s122 = scalar_lea.vmem %s0, %s121
          %s123 = smul.u32 2, %s17
        $region16: #{model_forward.4} parent=11 // pred_fallthru
          _
      $region12: #{model_forward.4} parent=5 // pred_fallthru
        _
      %p124 = scmp.lt.s32.totalorder %s8, 9
      // Predicated region
      $region17: #{model_forward.4} parent=5 // pred_check
        %p125 = pneg %p124
      $region18: #{model_forward.4} parent=5 // pred_check_branch
        %127 = sbr.rel (%p125) target = $region20
      $region19: #{model_forward.4} parent=5 // pred_region
        // Predicated region
        $region21: #{model_forward.4} parent=19 // pred_check
          %p128 = pneg %p66
        $region22: #{model_forward.4} parent=19 // pred_check_branch
          %130 = sbr.rel (%p128) target = $region24
        $region23: #{model_forward.4} parent=19 // pred_region
          %s131 = sand.u32 %s56, 1
          %s132 = sand.u32 %s56, 1
          %s133 = smul.addr %s132, 64
          %s134 = scalar_lea.vmem [#allocation2], %s133
          %s135 = smul.u32 4, %s16
          %s136 = smul.addr %s135, 4
          %s137 = scalar_lea.vmem %s1, %s136
          // Predicated region
          $region25: #{model_forward.4} parent=23 // pred_check
            _
          $region26: #{model_forward.4} parent=23 // pred_check_branch
            %139 = sbr.rel (0) target = $region28
          $region27: #{model_forward.4} parent=23 // pred_region
            // Predicated region
            $region29: #{model_forward.4} parent=27 // pred_check
              _
            $region30: #{model_forward.4} parent=27 // pred_check_branch
              %141 = sbr.rel (0) target = $region32
            $region31: #{model_forward.4} parent=27 // pred_region
              loop: start=0, step=1, limit=1
              $region33: #{model_forward.4} parent=31 // loop_pre_header
                _
              $region34: #{model_forward.4} parent=31 // loop_header
                %s143 = sphi 0, %s147
                %p144 = scmp.ge.s32.totalorder %s143, 1
                %s148 = sphi %s137, %s137
                %s149 = sphi %s134, %s134
              $region35: #{model_forward.4} parent=31 // loop_header_branch
                %146 = sbr.rel (%p144) target = $region39
              $region36: #{model_forward.4} parent=31 // loop_body
                %v150 = vld [vmem:[%s148] sm:$0xff]
                %151 = vst [vmem:[%s149] sm:$0xff] %v150
                %v152 = vld [vmem:[%s148 + $0x8] sm:$0xff]
                %153 = vst [vmem:[%s149 + $0x8] sm:$0xff] %v152
                %v154 = vld [vmem:[%s148 + $0x90] sm:$0xff]
                %155 = vst [vmem:[%s149 + $0x10] sm:$0xff] %v154
                %v156 = vld [vmem:[%s148 + $0x98] sm:$0xff]
                %157 = vst [vmem:[%s149 + $0x18] sm:$0xff] %v156
                %v158 = vld [vmem:[%s148 + $0x120] sm:$0xff]
                %159 = vst [vmem:[%s149 + $0x20] sm:$0xff] %v158
                %v160 = vld [vmem:[%s148 + $0x128] sm:$0xff]
                %161 = vst [vmem:[%s149 + $0x28] sm:$0xff] %v160
                %v162 = vld [vmem:[%s148 + $0x1b0] sm:$0xff]
                %163 = vst [vmem:[%s149 + $0x30] sm:$0xff] %v162
                %v164 = vld [vmem:[%s148 + $0x1b8] sm:$0xff]
                %165 = vst [vmem:[%s149 + $0x38] sm:$0xff] %v164
              $region37: #{model_forward.4} parent=31 // loop_footer
                %s147 = sadd.s32 1, %s143
              $region38: #{model_forward.4} parent=31 // loop_footer_branch
                %142 = sbr.rel target = $region34
              $region39: #{model_forward.4} parent=31 // loop_exit
                _
            $region32: #{model_forward.4} parent=27 // pred_fallthru
              _
            // Predicated region
            $region40: #{model_forward.4} parent=27 // pred_check
              _
            $region41: #{model_forward.4} parent=27 // pred_check_branch
              %167 = sbr.rel target = $region43
            $region42: #{model_forward.4} parent=27 // pred_region
              _
            $region43: #{model_forward.4} parent=27 // pred_fallthru
              _
          $region28: #{model_forward.4} parent=23 // pred_fallthru
            _
          %168 = vnop
        $region24: #{model_forward.4} parent=19 // pred_fallthru
          _
      $region20: #{model_forward.4} parent=5 // pred_fallthru
        _
      %p169 = scmp.le.s32.totalorder 1, %s8
      %p170 = scmp.lt.s32.totalorder %s8, 10
      %p171 = pnand %p169, %p170
      %p172 = pneg %p171
      // Predicated region
      $region44: #{model_forward.4} parent=5 // pred_check
        _
      $region45: #{model_forward.4} parent=5 // pred_check_branch
        %174 = sbr.rel (%p171) target = $region47
      $region46: #{model_forward.4} parent=5 // pred_region
        %s175 = ssub.s32 %s8, 1
        %s176 = sand.u32 %s59, 1
        %s177 = sand.u32 %s59, 1
        %s178 = smul.addr %s177, 64
        %s179 = scalar_lea.vmem [#allocation2], %s178
        // Predicated region
        $region48: #{model_forward.4} parent=46 // pred_check
          %p180 = pneg %p72
        $region49: #{model_forward.4} parent=46 // pred_check_branch
          %182 = sbr.rel (%p180) target = $region51
        $region50: #{model_forward.4} parent=46 // pred_region
          _
        $region51: #{model_forward.4} parent=46 // pred_fallthru
          _
        %s183 = smul.u32 2, %s17
        %p184 = scmp.lt.s32.totalorder %s183, 1
        %s185 = scalar_select %p184, %s183, 1
        %s186 = smul.addr %s185, 4
        %s187 = scalar_lea.vmem %s0, %s186
        %p188 = pneg %p46
        %p189 = pneg %p43
        %s190 = sand.u32 %s59, 1
        %s191 = sand.u32 %s59, 1
        %s192 = smul.addr %s191, 64
        %s193 = scalar_lea.vmem [#allocation2], %s192
        %p194 = pneg %p72
        %p195 = pneg %p69
        %p196 = pneg %p100
        %p197 = pneg %p97
        %s198 = sand.u32 %s87, 1
        %s199 = sand.u32 %s87, 1
        %s200 = smul.addr %s199, 32
        %s201 = scalar_lea.vmem [#allocation3], %s200
        %s202 = smul.u32 2, %s17
        %p203 = scmp.lt.s32.totalorder %s202, 1
        %s204 = scalar_select %p203, %s202, 1
        %s205 = smul.addr %s204, 4
        %s206 = scalar_lea.vmem %s0, %s205
        %s207 = smul.u32 2, %s17
        %s208 = smul.u32 4, %s18
        %s209 = smul.u32 2, %s17
        %s210 = smul.u32 4, %s18
        %v212 = vld [vmem:[%s206] sm:$0xf]
        %v213 = vld [vmem:[%s206 + $0x4] sm:$0xf]
        %v214 = vld [vmem:[%s179] sm:$0xff]
        %v215 = vld [vmem:[%s179 + $0x8] sm:$0xff]
        %v216 = vld [vmem:[%s179 + $0x10] sm:$0xff]
        %v217 = vld [vmem:[%s179 + $0x18] sm:$0xff]
        %v218 = vld [vmem:[%s179 + $0x20] sm:$0xff]
        %v219 = vld [vmem:[%s179 + $0x28] sm:$0xff]
        %v220 = vld [vmem:[%s179 + $0x30] sm:$0xff]
        %v221 = vld [vmem:[%s179 + $0x38] sm:$0xff]
        %v224 = vunpack.c.l.b16 %v212
        %v225 = vunpack.c.l.b16 %v213
        %v226 = vpack.c.b16 %v225, %v224
        %v235 = vunpack.c.l.b16 %v214
        %v236 = vunpack.c.h.b16 %v214
        %v237 = vunpack.c.l.b16 %v215
        %v238 = vunpack.c.h.b16 %v215
        %v239 = vunpack.c.l.b16 %v216
        %v240 = vunpack.c.h.b16 %v216
        %v241 = vunpack.c.l.b16 %v217
        %v242 = vunpack.c.h.b16 %v217
        %v243 = vunpack.c.l.b16 %v218
        %v244 = vunpack.c.h.b16 %v218
        %v245 = vunpack.c.l.b16 %v219
        %v246 = vunpack.c.h.b16 %v219
        %v247 = vunpack.c.l.b16 %v220
        %v248 = vunpack.c.h.b16 %v220
        %v249 = vunpack.c.l.b16 %v221
        %v250 = vunpack.c.h.b16 %v221
        %v251 = vpack.c.b16 %v239, %v235
        %v252 = vpack.c.b16 %v240, %v236
        %v253 = vpack.c.b16 %v241, %v237
        %v254 = vpack.c.b16 %v242, %v238
        %v255 = vpack.c.b16 %v247, %v243
        %v256 = vpack.c.b16 %v248, %v244
        %v257 = vpack.c.b16 %v249, %v245
        %v258 = vpack.c.b16 %v250, %v246
        %vm267 = vcmask 261120
        %v269 = vsel %vm267, %v226, 0
        %271 = vmatprep.subr.bf16.mxu0 %v252
        %272 = vmatpush1.bf16.msra.mxu0 %v251
        %273 = vmatprep.subr.bf16.mxu0 %v256
        %274 = vmatpush1.bf16.msra.mxu0 %v255
        %275 = vmatprep.subr.bf16.mxu0 0
        %276 = vmatpush1.bf16.msra.mxu0 0
        %277 = vmatprep.subr.bf16.mxu0 0
        %278 = vmatpush1.bf16.msra.mxu0 0
        %279 = vmatprep.subr.bf16.mxu0 0
        %280 = vmatpush1.bf16.msra.mxu0 0
        %281 = vmatprep.subr.bf16.mxu0 0
        %282 = vmatpush1.bf16.msra.mxu0 0
        %283 = vmatprep.subr.bf16.mxu0 0
        %284 = vmatpush1.bf16.msra.mxu0 0
        %285 = vmatprep.subr.bf16.mxu0 0
        %286 = vmatpush1.bf16.msra.mxu0 0
        %287 = vmatprep.subr.bf16.mxu0 0
        %288 = vmatpush1.bf16.msra.mxu0 0
        %289 = vmatprep.subr.bf16.mxu0 0
        %290 = vmatpush1.bf16.msra.mxu0 0
        %291 = vmatprep.subr.bf16.mxu0 0
        %292 = vmatpush1.bf16.msra.mxu0 0
        %293 = vmatprep.subr.bf16.mxu0 0
        %294 = vmatpush1.bf16.msra.mxu0 0
        %295 = vmatprep.subr.bf16.mxu0 0
        %296 = vmatpush1.bf16.msra.mxu0 0
        %297 = vmatprep.subr.bf16.mxu0 0
        %298 = vmatpush1.bf16.msra.mxu0 0
        %299 = vmatprep.subr.bf16.mxu0 0
        %300 = vmatpush1.bf16.msra.mxu0 0
        %301 = vmatprep.subr.bf16.mxu0 0
        %302 = vmatpush1.bf16.msra.mxu0 0
        %303 = vmatprep.mubr.bf16.mxu0 0
        %304 = vmatmul.mubr.bf16.gmra.mrb[0].mxu0 %v269
        %v305 = vpop.f32.mrb[0].mxu0
        %v306 = vadd.f32 0.0, %v305
        %v307 = vpop.f32.mrb[0].mxu0
        %v308 = vadd.f32 0.0, %v307
        %v309 = vpop.f32.mrb[0].mxu0
        %v310 = vadd.f32 0.0, %v309
        %v311 = vpop.f32.mrb[0].mxu0
        %v312 = vadd.f32 0.0, %v311
        %313 = vdwg.mxu0
        %314 = vmatprep.subr.bf16.mxu0 %v254
        %315 = vmatpush1.bf16.msra.mxu0 %v253
        %316 = vmatprep.subr.bf16.mxu0 %v258
        %317 = vmatpush1.bf16.msra.mxu0 %v257
        %318 = vmatprep.subr.bf16.mxu0 0
        %319 = vmatpush1.bf16.msra.mxu0 0
        %320 = vmatprep.subr.bf16.mxu0 0
        %321 = vmatpush1.bf16.msra.mxu0 0
        %322 = vmatprep.subr.bf16.mxu0 0
        %323 = vmatpush1.bf16.msra.mxu0 0
        %324 = vmatprep.subr.bf16.mxu0 0
        %325 = vmatpush1.bf16.msra.mxu0 0
        %326 = vmatprep.subr.bf16.mxu0 0
        %327 = vmatpush1.bf16.msra.mxu0 0
        %328 = vmatprep.subr.bf16.mxu0 0
        %329 = vmatpush1.bf16.msra.mxu0 0
        %330 = vmatprep.subr.bf16.mxu0 0
        %331 = vmatpush1.bf16.msra.mxu0 0
        %332 = vmatprep.subr.bf16.mxu0 0
        %333 = vmatpush1.bf16.msra.mxu0 0
        %334 = vmatprep.subr.bf16.mxu0 0
        %335 = vmatpush1.bf16.msra.mxu0 0
        %336 = vmatprep.subr.bf16.mxu0 0
        %337 = vmatpush1.bf16.msra.mxu0 0
        %338 = vmatprep.subr.bf16.mxu0 0
        %339 = vmatpush1.bf16.msra.mxu0 0
        %340 = vmatprep.subr.bf16.mxu0 0
        %341 = vmatpush1.bf16.msra.mxu0 0
        %342 = vmatprep.subr.bf16.mxu0 0
        %343 = vmatpush1.bf16.msra.mxu0 0
        %344 = vmatprep.subr.bf16.mxu0 0
        %345 = vmatpush1.bf16.msra.mxu0 0
        %346 = vmatprep.mubr.bf16.mxu0 0
        %347 = vmatmul.mubr.bf16.gmra.mrb[0].mxu0 %v269
        %v348 = vpop.f32.mrb[0].mxu0
        %v349 = vadd.f32 0.0, %v348
        %v350 = vpop.f32.mrb[0].mxu0
        %v351 = vadd.f32 0.0, %v350
        %v352 = vpop.f32.mrb[0].mxu0
        %v353 = vadd.f32 0.0, %v352
        %v354 = vpop.f32.mrb[0].mxu0
        %v355 = vadd.f32 0.0, %v354
        %356 = vdwg.mxu0
        %v357 = vpack.c.bf16 %v310, %v306
        %v358 = vpack.c.bf16 %v312, %v308
        %v359 = vpack.c.bf16 %v353, %v349
        %v360 = vpack.c.bf16 %v355, %v351
        %v365 = vunpack.c.l.b16 %v357
        %v366 = vunpack.c.l.b16 %v358
        %v367 = vunpack.c.l.b16 %v359
        %v368 = vunpack.c.l.b16 %v360
        %v369 = vunpack.c.h.b16 %v357
        %v370 = vunpack.c.h.b16 %v358
        %v371 = vunpack.c.h.b16 %v359
        %v372 = vunpack.c.h.b16 %v360
        %v373 = vpack.c.b16 %v366, %v365
        %v374 = vpack.c.b16 %v368, %v367
        %v375 = vpack.c.b16 %v370, %v369
        %v376 = vpack.c.b16 %v372, %v371
        %381 = vst [vmem:[%s201] sm:$0xff] %v373
        %382 = vst [vmem:[%s201 + $0x8] sm:$0xff] %v374
        %383 = vst [vmem:[%s201 + $0x10] sm:$0xff] %v375
        %384 = vst [vmem:[%s201 + $0x18] sm:$0xff] %v376
        %s385 = sand.u32 %s87, 1
        %s386 = sand.u32 %s87, 1
        %s387 = smul.addr %s386, 32
        %s388 = scalar_lea.vmem [#allocation3], %s387
        // Predicated region
        $region52: #{model_forward.4} parent=46 // pred_check
          %p389 = pneg %p97
        $region53: #{model_forward.4} parent=46 // pred_check_branch
          %391 = sbr.rel (%p389) target = $region55
        $region54: #{model_forward.4} parent=46 // pred_region
          %s392 = smul.u32 2, %s17
          %s393 = smul.u32 4, %s18
          %s394 = smul.addr %s392, 36
          %s395 = sadd.s32 %s393, %s394
          %s396 = smul.addr %s395, 4
          %s397 = scalar_lea.vmem %s2, %s396
          // Predicated region
          $region56: #{model_forward.4} parent=54 // pred_check
            _
          $region57: #{model_forward.4} parent=54 // pred_check_branch
            %399 = sbr.rel (0) target = $region59
          $region58: #{model_forward.4} parent=54 // pred_region
            // Predicated region
            $region60: #{model_forward.4} parent=58 // pred_check
              _
            $region61: #{model_forward.4} parent=58 // pred_check_branch
              %401 = sbr.rel (0) target = $region63
            $region62: #{model_forward.4} parent=58 // pred_region
              loop: start=0, step=1, limit=1
              $region64: #{model_forward.4} parent=62 // loop_pre_header
                _
              $region65: #{model_forward.4} parent=62 // loop_header
                %s403 = sphi 0, %s407
                %p404 = scmp.ge.s32.totalorder %s403, 1
                %s408 = sphi %s388, %s388
                %s409 = sphi %s397, %s397
              $region66: #{model_forward.4} parent=62 // loop_header_branch
                %406 = sbr.rel (%p404) target = $region70
              $region67: #{model_forward.4} parent=62 // loop_body
                %v410 = vld [vmem:[%s408] sm:$0xff]
                %411 = vst [vmem:[%s409] sm:$0xff] %v410
                %v412 = vld [vmem:[%s408 + $0x8] sm:$0xff]
                %413 = vst [vmem:[%s409 + $0x8] sm:$0xff] %v412
                %v414 = vld [vmem:[%s408 + $0x10] sm:$0xff]
                %415 = vst [vmem:[%s409 + $0x90] sm:$0xff] %v414
                %v416 = vld [vmem:[%s408 + $0x18] sm:$0xff]
                %417 = vst [vmem:[%s409 + $0x98] sm:$0xff] %v416
              $region68: #{model_forward.4} parent=62 // loop_footer
                %s407 = sadd.s32 1, %s403
              $region69: #{model_forward.4} parent=62 // loop_footer_branch
                %402 = sbr.rel target = $region65
              $region70: #{model_forward.4} parent=62 // loop_exit
                _
            $region63: #{model_forward.4} parent=58 // pred_fallthru
              _
            // Predicated region
            $region71: #{model_forward.4} parent=58 // pred_check
              _
            $region72: #{model_forward.4} parent=58 // pred_check_branch
              %419 = sbr.rel target = $region74
            $region73: #{model_forward.4} parent=58 // pred_region
              _
            $region74: #{model_forward.4} parent=58 // pred_fallthru
              _
          $region59: #{model_forward.4} parent=54 // pred_fallthru
            _
          %420 = vnop
        $region55: #{model_forward.4} parent=46 // pred_fallthru
          _
      $region47: #{model_forward.4} parent=5 // pred_fallthru
        _
      %p421 = scmp.le.s32.totalorder 2, %s8
      // Predicated region
      $region75: #{model_forward.4} parent=5 // pred_check
        %p422 = pneg %p421
      $region76: #{model_forward.4} parent=5 // pred_check_branch
        %424 = sbr.rel (%p422) target = $region78
      $region77: #{model_forward.4} parent=5 // pred_region
        %s425 = ssub.s32 %s8, 2
        // Predicated region
        $region79: #{model_forward.4} parent=77 // pred_check
          %p426 = pneg %p103
        $region80: #{model_forward.4} parent=77 // pred_check_branch
          %428 = sbr.rel (%p426) target = $region82
        $region81: #{model_forward.4} parent=77 // pred_region
          %s429 = sand.u32 %s88, 1
          %s430 = sand.u32 %s88, 1
          %s431 = smul.addr %s430, 32
          %s432 = scalar_lea.vmem [#allocation3], %s431
        $region82: #{model_forward.4} parent=77 // pred_fallthru
          _
      $region78: #{model_forward.4} parent=5 // pred_fallthru
        _
    $region6: #{model_forward.4} parent=1 // loop_footer
      %s12 = sadd.s32 1, %s8
    $region7: #{model_forward.4} parent=1 // loop_footer_branch
      %7 = sbr.rel target = $region3
    $region8: #{model_forward.4} parent=1 // loop_exit
      _

// kernel: model_forward.5
$region0: #{model_forward.5}
  #allocation0 [shape = 'u32[]', space=smem, size = 0x4, offset = 0x4, fixed_abs, tag = 'smem constant byte address 0x4 - core index']
  #allocation1 [shape = 'u32[144,128]{1,0:T(1,128)}', space=vmem, size = 0x12000, scoped, tag = 'internal scratch']
  %s0 = inlined_call_operand.vmem [shape: bf16[1536,16], index: 0, kind: input, shape index: {}]
  %s1 = inlined_call_operand.vmem [shape: bf16[16,7680], index: 1, kind: input, shape index: {}]
  %s2 = inlined_call_operand.vmem [shape: bf16[1536,7680], index: 2, kind: output, shape index: {}]
  %s3 = sld [smem:[#allocation0]]
  $region83: #{model_forward.5} parent=0
    _
  %s5 = ssub.s32 1, %s3
  %s6 = scalar_select 0, %s5, %s3
  $region1: #{model_forward.5} parent=0
    #allocation2 [shape = 'u8[32768]{0}', space=vmem, size = 0x8000, scoped, tag = 'input window, operand 1']
    #allocation3 [shape = 'u8[524288]{0}', space=vmem, size = 0x80000, scoped, tag = 'output window, operand 0']
    loop: start=0, step=1, limit=92
    $region2: #{model_forward.5} parent=1 // loop_pre_header
      _
    $region3: #{model_forward.5} parent=1 // loop_header
      %s8 = sphi 0, %s12
      %p9 = scmp.ge.s32.totalorder %s8, 92
      %s15 = sphi 0, %s27
      %s16 = sphi 0, %s23
      %s17 = sphi 0, %s15
      %s18 = sphi 0, %s16
      %s19 = sphi 0, %s17
      %s20 = sphi 0, %s18
      %s30 = sphi 0, %s32
      %s33 = sphi 0, %s30
      %s34 = sphi 0, %s33
      %s50 = sphi 0, %s34
      %s56 = sphi 0, %s58
      %s59 = sphi 0, %s56
      %s60 = sphi 0, %s59
      %s76 = sphi 0, %s60
      %s84 = sphi 0, %s86
      %s87 = sphi 0, %s84
      %s88 = sphi 0, %s87
      %s104 = sphi 0, %s88
    $region4: #{model_forward.5} parent=1 // loop_header_branch
      %11 = sbr.rel (%p9) target = $region8
    $region5: #{model_forward.5} parent=1 // loop_body
      %s13 = ssub.s32 %s8, 1
      %s14 = ssub.s32 %s8, 2
      %s21 = sadd.s32 1, %s16
      %p22 = scmp.ge.s32.totalorder %s21, 15
      %s23 = scalar_select %p22, 0, %s21
      %s24 = sadd.s32 1, %s15
      %s25 = scalar_select %p22, %s24, %s15
      %p26 = scmp.ge.s32.totalorder %s25, 6
      %s27 = scalar_select %p26, 0, %s25
      %s28 = ssub.s32 %s15, %s27
      %p29 = scmp.eq.s32.totalorder %s28, 0
      %s31 = sadd.s32 %s30, 1
      %s32 = scalar_select %p29, %s30, %s31
      %p35 = pneg %p29
      %p36 = scmp.eq.s32.totalorder %s8, 89
      %p37 = por %p35, %p36
      %p38 = scmp.ne.s32.totalorder %s30, %s33
      %p39 = scmp.eq.s32.totalorder %s8, 0
      %p40 = por %p38, %p39
      %p41 = scmp.ne.s32.totalorder %s30, %s33
      %p42 = scmp.eq.s32.totalorder %s13, 89
      %p43 = por %p41, %p42
      %p44 = scmp.ne.s32.totalorder %s33, %s34
      %p45 = scmp.eq.s32.totalorder %s13, 0
      %p46 = por %p44, %p45
      %p47 = scmp.ne.s32.totalorder %s33, %s34
      %p48 = scmp.eq.s32.totalorder %s14, 89
      %p49 = por %p47, %p48
      %p51 = scmp.ne.s32.totalorder %s34, %s50
      %p52 = scmp.eq.s32.totalorder %s14, 0
      %p53 = por %p51, %p52
      %s54 = ssub.s32 %s16, %s23
      %p55 = scmp.eq.s32.totalorder %s54, 0
      %s57 = sadd.s32 %s56, 1
      %s58 = scalar_select %p55, %s56, %s57
      %p61 = pneg %p55
      %p62 = scmp.eq.s32.totalorder %s8, 89
      %p63 = por %p61, %p62
      %p64 = scmp.ne.s32.totalorder %s56, %s59
      %p65 = scmp.eq.s32.totalorder %s8, 0
      %p66 = por %p64, %p65
      %p67 = scmp.ne.s32.totalorder %s56, %s59
      %p68 = scmp.eq.s32.totalorder %s13, 89
      %p69 = por %p67, %p68
      %p70 = scmp.ne.s32.totalorder %s59, %s60
      %p71 = scmp.eq.s32.totalorder %s13, 0
      %p72 = por %p70, %p71
      %p73 = scmp.ne.s32.totalorder %s59, %s60
      %p74 = scmp.eq.s32.totalorder %s14, 89
      %p75 = por %p73, %p74
      %p77 = scmp.ne.s32.totalorder %s60, %s76
      %p78 = scmp.eq.s32.totalorder %s14, 0
      %p79 = por %p77, %p78
      %s80 = ssub.s32 %s15, %s27
      %s81 = ssub.s32 %s16, %s23
      %s82 = sor.u32 %s80, %s81
      %p83 = scmp.eq.s32.totalorder %s82, 0
      %s85 = sadd.s32 %s84, 1
      %s86 = scalar_select %p83, %s84, %s85
      %p89 = pneg %p83
      %p90 = scmp.eq.s32.totalorder %s8, 89
      %p91 = por %p89, %p90
      %p92 = scmp.ne.s32.totalorder %s84, %s87
      %p93 = scmp.eq.s32.totalorder %s8, 0
      %p94 = por %p92, %p93
      %p95 = scmp.ne.s32.totalorder %s84, %s87
      %p96 = scmp.eq.s32.totalorder %s13, 89
      %p97 = por %p95, %p96
      %p98 = scmp.ne.s32.totalorder %s87, %s88
      %p99 = scmp.eq.s32.totalorder %s13, 0
      %p100 = por %p98, %p99
      %p101 = scmp.ne.s32.totalorder %s87, %s88
      %p102 = scmp.eq.s32.totalorder %s14, 89
      %p103 = por %p101, %p102
      %p105 = scmp.ne.s32.totalorder %s88, %s104
      %p106 = scmp.eq.s32.totalorder %s14, 0
      %p107 = por %p105, %p106
      %p108 = scmp.le.s32.totalorder 1, %s8
      %p109 = scmp.lt.s32.totalorder %s8, 91
      %p110 = pnand %p108, %p109
      %p111 = pneg %p110
      // Predicated region
      $region9: #{model_forward.5} parent=5 // pred_check
        _
      $region10: #{model_forward.5} parent=5 // pred_check_branch
        %113 = sbr.rel (%p110) target = $region12
      $region11: #{model_forward.5} parent=5 // pred_region
        %s114 = ssub.s32 %s8, 1
      $region12: #{model_forward.5} parent=5 // pred_fallthru
        _
      %p115 = scmp.lt.s32.totalorder %s8, 90
      // Predicated region
      $region13: #{model_forward.5} parent=5 // pred_check
        %p116 = pneg %p115
      $region14: #{model_forward.5} parent=5 // pred_check_branch
        %118 = sbr.rel (%p116) target = $region16
      $region15: #{model_forward.5} parent=5 // pred_region
        // Predicated region
        $region17: #{model_forward.5} parent=15 // pred_check
          %p119 = pneg %p40
        $region18: #{model_forward.5} parent=15 // pred_check_branch
          %121 = sbr.rel (%p119) target = $region20
        $region19: #{model_forward.5} parent=15 // pred_region
          %s122 = smul.u32 32, %s15
          %p123 = scmp.lt.s32.totalorder %s122, 191
          %s124 = scalar_select %p123, %s122, 191
          %s125 = smul.addr %s124, 4
          %s126 = scalar_lea.vmem %s0, %s125
          %s127 = smul.u32 32, %s15
        $region20: #{model_forward.5} parent=15 // pred_fallthru
          _
        // Predicated region
        $region21: #{model_forward.5} parent=15 // pred_check
          %p128 = pneg %p66
        $region22: #{model_forward.5} parent=15 // pred_check_branch
          %130 = sbr.rel (%p128) target = $region24
        $region23: #{model_forward.5} parent=15 // pred_region
          %s131 = sand.u32 %s56, 1
          %s132 = sand.u32 %s56, 1
          %s133 = smul.addr %s132, 32
          %s134 = scalar_lea.vmem [#allocation2], %s133
          %s135 = smul.u32 4, %s16
          %s136 = smul.addr %s135, 4
          %s137 = scalar_lea.vmem %s1, %s136
          // Predicated region
          $region25: #{model_forward.5} parent=23 // pred_check
            _
          $region26: #{model_forward.5} parent=23 // pred_check_branch
            %139 = sbr.rel (0) target = $region28
          $region27: #{model_forward.5} parent=23 // pred_region
            // Predicated region
            $region29: #{model_forward.5} parent=27 // pred_check
              _
            $region30: #{model_forward.5} parent=27 // pred_check_branch
              %141 = sbr.rel (0) target = $region32
            $region31: #{model_forward.5} parent=27 // pred_region
              loop: start=0, step=1, limit=1
              $region33: #{model_forward.5} parent=31 // loop_pre_header
                _
              $region34: #{model_forward.5} parent=31 // loop_header
                %s143 = sphi 0, %s147
                %p144 = scmp.ge.s32.totalorder %s143, 1
                %s148 = sphi %s137, %s137
                %s149 = sphi %s134, %s134
              $region35: #{model_forward.5} parent=31 // loop_header_branch
                %146 = sbr.rel (%p144) target = $region39
              $region36: #{model_forward.5} parent=31 // loop_body
                %v150 = vld [vmem:[%s148] sm:$0xff]
                %151 = vst [vmem:[%s149] sm:$0xff] %v150
                %v152 = vld [vmem:[%s148 + $0x8] sm:$0xff]
                %153 = vst [vmem:[%s149 + $0x8] sm:$0xff] %v152
                %v154 = vld [vmem:[%s148 + $0xf0] sm:$0xff]
                %155 = vst [vmem:[%s149 + $0x10] sm:$0xff] %v154
                %v156 = vld [vmem:[%s148 + $0xf8] sm:$0xff]
                %157 = vst [vmem:[%s149 + $0x18] sm:$0xff] %v156
              $region37: #{model_forward.5} parent=31 // loop_footer
                %s147 = sadd.s32 1, %s143
              $region38: #{model_forward.5} parent=31 // loop_footer_branch
                %142 = sbr.rel target = $region34
              $region39: #{model_forward.5} parent=31 // loop_exit
                _
            $region32: #{model_forward.5} parent=27 // pred_fallthru
              _
            // Predicated region
            $region40: #{model_forward.5} parent=27 // pred_check
              _
            $region41: #{model_forward.5} parent=27 // pred_check_branch
              %159 = sbr.rel target = $region43
            $region42: #{model_forward.5} parent=27 // pred_region
              _
            $region43: #{model_forward.5} parent=27 // pred_fallthru
              _
          $region28: #{model_forward.5} parent=23 // pred_fallthru
            _
          %160 = vnop
        $region24: #{model_forward.5} parent=15 // pred_fallthru
          _
      $region16: #{model_forward.5} parent=5 // pred_fallthru
        _
      %p161 = scmp.le.s32.totalorder 1, %s8
      %p162 = scmp.lt.s32.totalorder %s8, 91
      %p163 = pnand %p161, %p162
      %p164 = pneg %p163
      // Predicated region
      $region44: #{model_forward.5} parent=5 // pred_check
        _
      $region45: #{model_forward.5} parent=5 // pred_check_branch
        %166 = sbr.rel (%p163) target = $region47
      $region46: #{model_forward.5} parent=5 // pred_region
        %s167 = ssub.s32 %s8, 1
        %s168 = sand.u32 %s59, 1
        %s169 = sand.u32 %s59, 1
        %s170 = smul.addr %s169, 32
        %s171 = scalar_lea.vmem [#allocation2], %s170
        // Predicated region
        $region48: #{model_forward.5} parent=46 // pred_check
          %p172 = pneg %p72
        $region49: #{model_forward.5} parent=46 // pred_check_branch
          %174 = sbr.rel (%p172) target = $region51
        $region50: #{model_forward.5} parent=46 // pred_region
          _
        $region51: #{model_forward.5} parent=46 // pred_fallthru
          _
        %s175 = smul.u32 32, %s17
        %p176 = scmp.lt.s32.totalorder %s175, 191
        %s177 = scalar_select %p176, %s175, 191
        %s178 = smul.addr %s177, 4
        %s179 = scalar_lea.vmem %s0, %s178
        %p180 = pneg %p46
        %p181 = pneg %p43
        %s182 = sand.u32 %s59, 1
        %s183 = sand.u32 %s59, 1
        %s184 = smul.addr %s183, 32
        %s185 = scalar_lea.vmem [#allocation2], %s184
        %p186 = pneg %p72
        %p187 = pneg %p69
        %p188 = pneg %p100
        %p189 = pneg %p97
        %s190 = sand.u32 %s87, 1
        %s191 = sand.u32 %s87, 1
        %s192 = smul.addr %s191, 512
        %s193 = scalar_lea.vmem [#allocation3], %s192
        %s194 = smul.u32 32, %s17
        %p195 = scmp.lt.s32.totalorder %s194, 191
        %s196 = scalar_select %p195, %s194, 191
        %s197 = smul.addr %s196, 4
        %s198 = scalar_lea.vmem %s0, %s197
        %s199 = smul.u32 32, %s17
        %s200 = smul.u32 4, %s18
        %s201 = smul.u32 32, %s17
        %s202 = smul.u32 4, %s18
        %v204 = vld [vmem:[%s198] sm:$0xf]
        %v205 = vld [vmem:[%s198 + $0x4] sm:$0xf]
        %v206 = vld [vmem:[%s198 + $0x8] sm:$0xf]
        %v207 = vld [vmem:[%s198 + $0xc] sm:$0xf]
        %v208 = vld [vmem:[%s198 + $0x10] sm:$0xf]
        %v209 = vld [vmem:[%s198 + $0x14] sm:$0xf]
        %v210 = vld [vmem:[%s198 + $0x18] sm:$0xf]
        %v211 = vld [vmem:[%s198 + $0x1c] sm:$0xf]
        %v212 = vld [vmem:[%s198 + $0x20] sm:$0xf]
        %v213 = vld [vmem:[%s198 + $0x24] sm:$0xf]
        %v214 = vld [vmem:[%s198 + $0x28] sm:$0xf]
        %v215 = vld [vmem:[%s198 + $0x2c] sm:$0xf]
        %v216 = vld [vmem:[%s198 + $0x30] sm:$0xf]
        %v217 = vld [vmem:[%s198 + $0x34] sm:$0xf]
        %v218 = vld [vmem:[%s198 + $0x38] sm:$0xf]
        %v219 = vld [vmem:[%s198 + $0x3c] sm:$0xf]
        %v220 = vld [vmem:[%s198 + $0x40] sm:$0xf]
        %v221 = vld [vmem:[%s198 + $0x44] sm:$0xf]
        %v222 = vld [vmem:[%s198 + $0x48] sm:$0xf]
        %v223 = vld [vmem:[%s198 + $0x4c] sm:$0xf]
        %v224 = vld [vmem:[%s198 + $0x50] sm:$0xf]
        %v225 = vld [vmem:[%s198 + $0x54] sm:$0xf]
        %v226 = vld [vmem:[%s198 + $0x58] sm:$0xf]
        %v227 = vld [vmem:[%s198 + $0x5c] sm:$0xf]
        %v228 = vld [vmem:[%s198 + $0x60] sm:$0xf]
        %v229 = vld [vmem:[%s198 + $0x64] sm:$0xf]
        %v230 = vld [vmem:[%s198 + $0x68] sm:$0xf]
        %v231 = vld [vmem:[%s198 + $0x6c] sm:$0xf]
        %v232 = vld [vmem:[%s198 + $0x70] sm:$0xf]
        %v233 = vld [vmem:[%s198 + $0x74] sm:$0xf]
        %v234 = vld [vmem:[%s198 + $0x78] sm:$0xf]
        %v235 = vld [vmem:[%s198 + $0x7c] sm:$0xf]
        %v236 = vld [vmem:[%s171] sm:$0xff]
        %v237 = vld [vmem:[%s171 + $0x8] sm:$0xff]
        %v238 = vld [vmem:[%s171 + $0x10] sm:$0xff]
        %v239 = vld [vmem:[%s171 + $0x18] sm:$0xff]
        %v272 = vunpack.c.l.b16 %v204
        %v273 = vunpack.c.l.b16 %v205
        %v274 = vunpack.c.l.b16 %v206
        %v275 = vunpack.c.l.b16 %v207
        %v276 = vunpack.c.l.b16 %v208
        %v277 = vunpack.c.l.b16 %v209
        %v278 = vunpack.c.l.b16 %v210
        %v279 = vunpack.c.l.b16 %v211
        %v280 = vunpack.c.l.b16 %v212
        %v281 = vunpack.c.l.b16 %v213
        %v282 = vunpack.c.l.b16 %v214
        %v283 = vunpack.c.l.b16 %v215
        %v284 = vunpack.c.l.b16 %v216
        %v285 = vunpack.c.l.b16 %v217
        %v286 = vunpack.c.l.b16 %v218
        %v287 = vunpack.c.l.b16 %v219
        %v288 = vunpack.c.l.b16 %v220
        %v289 = vunpack.c.l.b16 %v221
        %v290 = vunpack.c.l.b16 %v222
        %v291 = vunpack.c.l.b16 %v223
        %v292 = vunpack.c.l.b16 %v224
        %v293 = vunpack.c.l.b16 %v225
        %v294 = vunpack.c.l.b16 %v226
        %v295 = vunpack.c.l.b16 %v227
        %v296 = vunpack.c.l.b16 %v228
        %v297 = vunpack.c.l.b16 %v229
        %v298 = vunpack.c.l.b16 %v230
        %v299 = vunpack.c.l.b16 %v231
        %v300 = vunpack.c.l.b16 %v232
        %v301 = vunpack.c.l.b16 %v233
        %v302 = vunpack.c.l.b16 %v234
        %v303 = vunpack.c.l.b16 %v235
        %v304 = vpack.c.b16 %v273, %v272
        %v305 = vpack.c.b16 %v275, %v274
        %v306 = vpack.c.b16 %v277, %v276
        %v307 = vpack.c.b16 %v279, %v278
        %v308 = vpack.c.b16 %v281, %v280
        %v309 = vpack.c.b16 %v283, %v282
        %v310 = vpack.c.b16 %v285, %v284
        %v311 = vpack.c.b16 %v287, %v286
        %v312 = vpack.c.b16 %v289, %v288
        %v313 = vpack.c.b16 %v291, %v290
        %v314 = vpack.c.b16 %v293, %v292
        %v315 = vpack.c.b16 %v295, %v294
        %v316 = vpack.c.b16 %v297, %v296
        %v317 = vpack.c.b16 %v299, %v298
        %v318 = vpack.c.b16 %v301, %v300
        %v319 = vpack.c.b16 %v303, %v302
        %v324 = vunpack.c.l.b16 %v236
        %v325 = vunpack.c.h.b16 %v236
        %v326 = vunpack.c.l.b16 %v237
        %v327 = vunpack.c.h.b16 %v237
        %v328 = vunpack.c.l.b16 %v238
        %v329 = vunpack.c.h.b16 %v238
        %v330 = vunpack.c.l.b16 %v239
        %v331 = vunpack.c.h.b16 %v239
        %v332 = vpack.c.b16 %v328, %v324
        %v333 = vpack.c.b16 %v329, %v325
        %v334 = vpack.c.b16 %v330, %v326
        %v335 = vpack.c.b16 %v331, %v327
        %vm340 = vcmask 130048
        %v342 = vsel %vm340, %v304, 0
        %v345 = vsel %vm340, %v305, 0
        %v348 = vsel %vm340, %v306, 0
        %v351 = vsel %vm340, %v307, 0
        %v354 = vsel %vm340, %v308, 0
        %v357 = vsel %vm340, %v309, 0
        %v360 = vsel %vm340, %v310, 0
        %v363 = vsel %vm340, %v311, 0
        %v366 = vsel %vm340, %v312, 0
        %v369 = vsel %vm340, %v313, 0
        %v372 = vsel %vm340, %v314, 0
        %v375 = vsel %vm340, %v315, 0
        %v378 = vsel %vm340, %v316, 0
        %v381 = vsel %vm340, %v317, 0
        %v384 = vsel %vm340, %v318, 0
        %v387 = vsel %vm340, %v319, 0
        %389 = vmatprep.subr.bf16.mxu0 %v333
        %390 = vmatpush1.bf16.msra.mxu0 %v332
        %391 = vmatprep.subr.bf16.mxu0 0
        %392 = vmatpush1.bf16.msra.mxu0 0
        %393 = vmatprep.subr.bf16.mxu0 0
        %394 = vmatpush1.bf16.msra.mxu0 0
        %395 = vmatprep.subr.bf16.mxu0 0
        %396 = vmatpush1.bf16.msra.mxu0 0
        %397 = vmatprep.subr.bf16.mxu0 0
        %398 = vmatpush1.bf16.msra.mxu0 0
        %399 = vmatprep.subr.bf16.mxu0 0
        %400 = vmatpush1.bf16.msra.mxu0 0
        %401 = vmatprep.subr.bf16.mxu0 0
        %402 = vmatpush1.bf16.msra.mxu0 0
        %403 = vmatprep.subr.bf16.mxu0 0
        %404 = vmatpush1.bf16.msra.mxu0 0
        %405 = vmatprep.subr.bf16.mxu0 0
        %406 = vmatpush1.bf16.msra.mxu0 0
        %407 = vmatprep.subr.bf16.mxu0 0
        %408 = vmatpush1.bf16.msra.mxu0 0
        %409 = vmatprep.subr.bf16.mxu0 0
        %410 = vmatpush1.bf16.msra.mxu0 0
        %411 = vmatprep.subr.bf16.mxu0 0
        %412 = vmatpush1.bf16.msra.mxu0 0
        %413 = vmatprep.subr.bf16.mxu0 0
        %414 = vmatpush1.bf16.msra.mxu0 0
        %415 = vmatprep.subr.bf16.mxu0 0
        %416 = vmatpush1.bf16.msra.mxu0 0
        %417 = vmatprep.subr.bf16.mxu0 0
        %418 = vmatpush1.bf16.msra.mxu0 0
        %419 = vmatprep.subr.bf16.mxu0 0
        %420 = vmatpush1.bf16.msra.mxu0 0
        %421 = vmatprep.mubr.bf16.mxu0 0
        %422 = vmatmul.mubr.bf16.gmra.mrb[0].mxu0 %v342
        %v423 = vpop.f32.mrb[0].mxu0
        %v424 = vadd.f32 0.0, %v423
        %v425 = vpop.f32.mrb[0].mxu0
        %v426 = vadd.f32 0.0, %v425
        %v427 = vpop.f32.mrb[0].mxu0
        %v428 = vadd.f32 0.0, %v427
        %v429 = vpop.f32.mrb[0].mxu0
        %v430 = vadd.f32 0.0, %v429
        %431 = vmatprep.mubr.bf16.mxu0 0
        %432 = vmatmul.mubr.bf16.gmra.mrb[0].mxu0 %v345
        %v433 = vpop.f32.mrb[0].mxu0
        %v434 = vadd.f32 0.0, %v433
        %v435 = vpop.f32.mrb[0].mxu0
        %v436 = vadd.f32 0.0, %v435
        %v437 = vpop.f32.mrb[0].mxu0
        %v438 = vadd.f32 0.0, %v437
        %v439 = vpop.f32.mrb[0].mxu0
        %v440 = vadd.f32 0.0, %v439
        %441 = vmatprep.mubr.bf16.mxu0 0
        %442 = vmatmul.mubr.bf16.gmra.mrb[0].mxu0 %v348
        %v443 = vpop.f32.mrb[0].mxu0
        %v444 = vadd.f32 0.0, %v443
        %v445 = vpop.f32.mrb[0].mxu0
        %v446 = vadd.f32 0.0, %v445
        %v447 = vpop.f32.mrb[0].mxu0
        %v448 = vadd.f32 0.0, %v447
        %v449 = vpop.f32.mrb[0].mxu0
        %v450 = vadd.f32 0.0, %v449
        %451 = vmatprep.mubr.bf16.mxu0 0
        %452 = vmatmul.mubr.bf16.gmra.mrb[0].mxu0 %v351
        %v453 = vpop.f32.mrb[0].mxu0
        %v454 = vadd.f32 0.0, %v453
        %v455 = vpop.f32.mrb[0].mxu0
        %v456 = vadd.f32 0.0, %v455
        %v457 = vpop.f32.mrb[0].mxu0
        %v458 = vadd.f32 0.0, %v457
        %v459 = vpop.f32.mrb[0].mxu0
        %v460 = vadd.f32 0.0, %v459
        %461 = vmatprep.mubr.bf16.mxu0 0
        %462 = vmatmul.mubr.bf16.gmra.mrb[0].mxu0 %v354
        %v463 = vpop.f32.mrb[0].mxu0
        %v464 = vadd.f32 0.0, %v463
        %v465 = vpop.f32.mrb[0].mxu0
        %v466 = vadd.f32 0.0, %v465
        %v467 = vpop.f32.mrb[0].mxu0
        %v468 = vadd.f32 0.0, %v467
        %v469 = vpop.f32.mrb[0].mxu0
        %v470 = vadd.f32 0.0, %v469
        %471 = vmatprep.mubr.bf16.mxu0 0
        %472 = vmatmul.mubr.bf16.gmra.mrb[0].mxu0 %v357
        %v473 = vpop.f32.mrb[0].mxu0
        %v474 = vadd.f32 0.0, %v473
        %v475 = vpop.f32.mrb[0].mxu0
        %v476 = vadd.f32 0.0, %v475
        %v477 = vpop.f32.mrb[0].mxu0
        %v478 = vadd.f32 0.0, %v477
        %v479 = vpop.f32.mrb[0].mxu0
        %v480 = vadd.f32 0.0, %v479
        %481 = vmatprep.mubr.bf16.mxu0 0
        %482 = vmatmul.mubr.bf16.gmra.mrb[0].mxu0 %v360
        %v483 = vpop.f32.mrb[0].mxu0
        %v484 = vadd.f32 0.0, %v483
        %v485 = vpop.f32.mrb[0].mxu0
        %v486 = vadd.f32 0.0, %v485
        %v487 = vpop.f32.mrb[0].mxu0
        %v488 = vadd.f32 0.0, %v487
        %v489 = vpop.f32.mrb[0].mxu0
        %v490 = vadd.f32 0.0, %v489
        %491 = vmatprep.mubr.bf16.mxu0 0
        %492 = vmatmul.mubr.bf16.gmra.mrb[0].mxu0 %v363
        %v493 = vpop.f32.mrb[0].mxu0
        %v494 = vadd.f32 0.0, %v493
        %v495 = vpop.f32.mrb[0].mxu0
        %v496 = vadd.f32 0.0, %v495
        %v497 = vpop.f32.mrb[0].mxu0
        %v498 = vadd.f32 0.0, %v497
        %v499 = vpop.f32.mrb[0].mxu0
        %v500 = vadd.f32 0.0, %v499
        %501 = vmatprep.mubr.bf16.mxu0 0
        %502 = vmatmul.mubr.bf16.gmra.mrb[0].mxu0 %v366
        %v503 = vpop.f32.mrb[0].mxu0
        %v504 = vadd.f32 0.0, %v503
        %v505 = vpop.f32.mrb[0].mxu0
        %v506 = vadd.f32 0.0, %v505
        %v507 = vpop.f32.mrb[0].mxu0
        %v508 = vadd.f32 0.0, %v507
        %v509 = vpop.f32.mrb[0].mxu0
        %v510 = vadd.f32 0.0, %v509
        %511 = vmatprep.mubr.bf16.mxu0 0
        %512 = vmatmul.mubr.bf16.gmra.mrb[0].mxu0 %v369
        %v513 = vpop.f32.mrb[0].mxu0
        %v514 = vadd.f32 0.0, %v513
        %v515 = vpop.f32.mrb[0].mxu0
        %v516 = vadd.f32 0.0, %v515
        %v517 = vpop.f32.mrb[0].mxu0
        %v518 = vadd.f32 0.0, %v517
        %v519 = vpop.f32.mrb[0].mxu0
        %v520 = vadd.f32 0.0, %v519
        %521 = vmatprep.mubr.bf16.mxu0 0
        %522 = vmatmul.mubr.bf16.gmra.mrb[0].mxu0 %v372
        %v523 = vpop.f32.mrb[0].mxu0
        %v524 = vadd.f32 0.0, %v523
        %v525 = vpop.f32.mrb[0].mxu0
        %v526 = vadd.f32 0.0, %v525
        %v527 = vpop.f32.mrb[0].mxu0
        %v528 = vadd.f32 0.0, %v527
        %v529 = vpop.f32.mrb[0].mxu0
        %v530 = vadd.f32 0.0, %v529
        %531 = vmatprep.mubr.bf16.mxu0 0
        %532 = vmatmul.mubr.bf16.gmra.mrb[0].mxu0 %v375
        %v533 = vpop.f32.mrb[0].mxu0
        %v534 = vadd.f32 0.0, %v533
        %v535 = vpop.f32.mrb[0].mxu0
        %v536 = vadd.f32 0.0, %v535
        %v537 = vpop.f32.mrb[0].mxu0
        %v538 = vadd.f32 0.0, %v537
        %v539 = vpop.f32.mrb[0].mxu0
        %v540 = vadd.f32 0.0, %v539
        %541 = vmatprep.mubr.bf16.mxu0 0
        %542 = vmatmul.mubr.bf16.gmra.mrb[0].mxu0 %v378
        %v543 = vpop.f32.mrb[0].mxu0
        %v544 = vadd.f32 0.0, %v543
        %v545 = vpop.f32.mrb[0].mxu0
        %v546 = vadd.f32 0.0, %v545
        %v547 = vpop.f32.mrb[0].mxu0
        %v548 = vadd.f32 0.0, %v547
        %v549 = vpop.f32.mrb[0].mxu0
        %v550 = vadd.f32 0.0, %v549
        %551 = vmatprep.mubr.bf16.mxu0 0
        %552 = vmatmul.mubr.bf16.gmra.mrb[0].mxu0 %v381
        %v553 = vpop.f32.mrb[0].mxu0
        %v554 = vadd.f32 0.0, %v553
        %v555 = vpop.f32.mrb[0].mxu0
        %v556 = vadd.f32 0.0, %v555
        %v557 = vpop.f32.mrb[0].mxu0
        %v558 = vadd.f32 0.0, %v557
        %v559 = vpop.f32.mrb[0].mxu0
        %v560 = vadd.f32 0.0, %v559
        %561 = vmatprep.mubr.bf16.mxu0 0
        %562 = vmatmul.mubr.bf16.gmra.mrb[0].mxu0 %v384
        %v563 = vpop.f32.mrb[0].mxu0
        %v564 = vadd.f32 0.0, %v563
        %v565 = vpop.f32.mrb[0].mxu0
        %v566 = vadd.f32 0.0, %v565
        %v567 = vpop.f32.mrb[0].mxu0
        %v568 = vadd.f32 0.0, %v567
        %v569 = vpop.f32.mrb[0].mxu0
        %v570 = vadd.f32 0.0, %v569
        %571 = vmatprep.mubr.bf16.mxu0 0
        %572 = vmatmul.mubr.bf16.gmra.mrb[0].mxu0 %v387
        %v573 = vpop.f32.mrb[0].mxu0
        %v574 = vadd.f32 0.0, %v573
        %v575 = vpop.f32.mrb[0].mxu0
        %v576 = vadd.f32 0.0, %v575
        %v577 = vpop.f32.mrb[0].mxu0
        %v578 = vadd.f32 0.0, %v577
        %v579 = vpop.f32.mrb[0].mxu0
        %v580 = vadd.f32 0.0, %v579
        %581 = vdwg.mxu0
        %582 = vmatprep.subr.bf16.mxu0 %v335
        %583 = vmatpush1.bf16.msra.mxu0 %v334
        %584 = vmatprep.subr.bf16.mxu0 0
        %585 = vmatpush1.bf16.msra.mxu0 0
        %586 = vmatprep.subr.bf16.mxu0 0
        %587 = vmatpush1.bf16.msra.mxu0 0
        %588 = vmatprep.subr.bf16.mxu0 0
        %589 = vmatpush1.bf16.msra.mxu0 0
        %590 = vmatprep.subr.bf16.mxu0 0
        %591 = vmatpush1.bf16.msra.mxu0 0
        %592 = vmatprep.subr.bf16.mxu0 0
        %593 = vmatpush1.bf16.msra.mxu0 0
        %594 = vmatprep.subr.bf16.mxu0 0
        %595 = vmatpush1.bf16.msra.mxu0 0
        %596 = vmatprep.subr.bf16.mxu0 0
        %597 = vmatpush1.bf16.msra.mxu0 0
        %598 = vmatprep.subr.bf16.mxu0 0
        %599 = vmatpush1.bf16.msra.mxu0 0
        %600 = vmatprep.subr.bf16.mxu0 0
        %601 = vmatpush1.bf16.msra.mxu0 0
        %602 = vmatprep.subr.bf16.mxu0 0
        %603 = vmatpush1.bf16.msra.mxu0 0
        %604 = vmatprep.subr.bf16.mxu0 0
        %605 = vmatpush1.bf16.msra.mxu0 0
        %606 = vmatprep.subr.bf16.mxu0 0
        %607 = vmatpush1.bf16.msra.mxu0 0
        %608 = vmatprep.subr.bf16.mxu0 0
        %609 = vmatpush1.bf16.msra.mxu0 0
        %610 = vmatprep.subr.bf16.mxu0 0
        %611 = vmatpush1.bf16.msra.mxu0 0
        %612 = vmatprep.subr.bf16.mxu0 0
        %613 = vmatpush1.bf16.msra.mxu0 0
        %614 = vmatprep.mubr.bf16.mxu0 0
        %615 = vmatmul.mubr.bf16.gmra.mrb[0].mxu0 %v342
        %v616 = vpop.f32.mrb[0].mxu0
        %v617 = vadd.f32 0.0, %v616
        %v618 = vpop.f32.mrb[0].mxu0
        %v619 = vadd.f32 0.0, %v618
        %v620 = vpop.f32.mrb[0].mxu0
        %v621 = vadd.f32 0.0, %v620
        %v622 = vpop.f32.mrb[0].mxu0
        %v623 = vadd.f32 0.0, %v622
        %624 = vmatprep.mubr.bf16.mxu0 0
        %625 = vmatmul.mubr.bf16.gmra.mrb[0].mxu0 %v345
        %v626 = vpop.f32.mrb[0].mxu0
        %v627 = vadd.f32 0.0, %v626
        %v628 = vpop.f32.mrb[0].mxu0
        %v629 = vadd.f32 0.0, %v628
        %v630 = vpop.f32.mrb[0].mxu0
        %v631 = vadd.f32 0.0, %v630
        %v632 = vpop.f32.mrb[0].mxu0
        %v633 = vadd.f32 0.0, %v632
        %634 = vmatprep.mubr.bf16.mxu0 0
        %635 = vmatmul.mubr.bf16.gmra.mrb[0].mxu0 %v348
        %v636 = vpop.f32.mrb[0].mxu0
        %v637 = vadd.f32 0.0, %v636
        %v638 = vpop.f32.mrb[0].mxu0
        %v639 = vadd.f32 0.0, %v638
        %v640 = vpop.f32.mrb[0].mxu0
        %v641 = vadd.f32 0.0, %v640
        %v642 = vpop.f32.mrb[0].mxu0
        %v643 = vadd.f32 0.0, %v642
        %644 = vmatprep.mubr.bf16.mxu0 0
        %645 = vmatmul.mubr.bf16.gmra.mrb[0].mxu0 %v351
        %v646 = vpop.f32.mrb[0].mxu0
        %v647 = vadd.f32 0.0, %v646
        %v648 = vpop.f32.mrb[0].mxu0
        %v649 = vadd.f32 0.0, %v648
        %v650 = vpop.f32.mrb[0].mxu0
        %v651 = vadd.f32 0.0, %v650
        %v652 = vpop.f32.mrb[0].mxu0
        %v653 = vadd.f32 0.0, %v652
        %654 = vmatprep.mubr.bf16.mxu0 0
        %655 = vmatmul.mubr.bf16.gmra.mrb[0].mxu0 %v354
        %v656 = vpop.f32.mrb[0].mxu0
        %v657 = vadd.f32 0.0, %v656
        %v658 = vpop.f32.mrb[0].mxu0
        %v659 = vadd.f32 0.0, %v658
        %v660 = vpop.f32.mrb[0].mxu0
        %v661 = vadd.f32 0.0, %v660
        %v662 = vpop.f32.mrb[0].mxu0
        %v663 = vadd.f32 0.0, %v662
        %664 = vmatprep.mubr.bf16.mxu0 0
        %665 = vmatmul.mubr.bf16.gmra.mrb[0].mxu0 %v357
        %v666 = vpop.f32.mrb[0].mxu0
        %v667 = vadd.f32 0.0, %v666
        %v668 = vpop.f32.mrb[0].mxu0
        %v669 = vadd.f32 0.0, %v668
        %v670 = vpop.f32.mrb[0].mxu0
        %v671 = vadd.f32 0.0, %v670
        %v672 = vpop.f32.mrb[0].mxu0
        %v673 = vadd.f32 0.0, %v672
        %674 = vmatprep.mubr.bf16.mxu0 0
        %675 = vmatmul.mubr.bf16.gmra.mrb[0].mxu0 %v360
        %v676 = vpop.f32.mrb[0].mxu0
        %v677 = vadd.f32 0.0, %v676
        %v678 = vpop.f32.mrb[0].mxu0
        %v679 = vadd.f32 0.0, %v678
        %v680 = vpop.f32.mrb[0].mxu0
        %v681 = vadd.f32 0.0, %v680
        %v682 = vpop.f32.mrb[0].mxu0
        %v683 = vadd.f32 0.0, %v682
        %684 = vmatprep.mubr.bf16.mxu0 0
        %685 = vmatmul.mubr.bf16.gmra.mrb[0].mxu0 %v363
        %v686 = vpop.f32.mrb[0].mxu0
        %v687 = vadd.f32 0.0, %v686
        %v688 = vpop.f32.mrb[0].mxu0
        %v689 = vadd.f32 0.0, %v688
        %v690 = vpop.f32.mrb[0].mxu0
        %v691 = vadd.f32 0.0, %v690
        %v692 = vpop.f32.mrb[0].mxu0
        %v693 = vadd.f32 0.0, %v692
        %694 = vmatprep.mubr.bf16.mxu0 0
        %695 = vmatmul.mubr.bf16.gmra.mrb[0].mxu0 %v366
        %v696 = vpop.f32.mrb[0].mxu0
        %v697 = vadd.f32 0.0, %v696
        %v698 = vpop.f32.mrb[0].mxu0
        %v699 = vadd.f32 0.0, %v698
        %v700 = vpop.f32.mrb[0].mxu0
        %v701 = vadd.f32 0.0, %v700
        %v702 = vpop.f32.mrb[0].mxu0
        %v703 = vadd.f32 0.0, %v702
        %704 = vmatprep.mubr.bf16.mxu0 0
        %705 = vmatmul.mubr.bf16.gmra.mrb[0].mxu0 %v369
        %v706 = vpop.f32.mrb[0].mxu0
        %v707 = vadd.f32 0.0, %v706
        %v708 = vpop.f32.mrb[0].mxu0
        %v709 = vadd.f32 0.0, %v708
        %v710 = vpop.f32.mrb[0].mxu0
        %v711 = vadd.f32 0.0, %v710
        %v712 = vpop.f32.mrb[0].mxu0
        %v713 = vadd.f32 0.0, %v712
        %714 = vmatprep.mubr.bf16.mxu0 0
        %715 = vmatmul.mubr.bf16.gmra.mrb[0].mxu0 %v372
        %v716 = vpop.f32.mrb[0].mxu0
        %v717 = vadd.f32 0.0, %v716
        %v718 = vpop.f32.mrb[0].mxu0
        %v719 = vadd.f32 0.0, %v718
        %v720 = vpop.f32.mrb[0].mxu0
        %v721 = vadd.f32 0.0, %v720
        %v722 = vpop.f32.mrb[0].mxu0
        %v723 = vadd.f32 0.0, %v722
        %724 = vmatprep.mubr.bf16.mxu0 0
        %725 = vmatmul.mubr.bf16.gmra.mrb[0].mxu0 %v375
        %v726 = vpop.f32.mrb[0].mxu0
        %v727 = vadd.f32 0.0, %v726
        %v728 = vpop.f32.mrb[0].mxu0
        %v729 = vadd.f32 0.0, %v728
        %v730 = vpop.f32.mrb[0].mxu0
        %v731 = vadd.f32 0.0, %v730
        %v732 = vpop.f32.mrb[0].mxu0
        %v733 = vadd.f32 0.0, %v732
        %734 = vmatprep.mubr.bf16.mxu0 0
        %735 = vmatmul.mubr.bf16.gmra.mrb[0].mxu0 %v378
        %v736 = vpop.f32.mrb[0].mxu0
        %v737 = vadd.f32 0.0, %v736
        %v738 = vpop.f32.mrb[0].mxu0
        %v739 = vadd.f32 0.0, %v738
        %v740 = vpop.f32.mrb[0].mxu0
        %v741 = vadd.f32 0.0, %v740
        %v742 = vpop.f32.mrb[0].mxu0
        %v743 = vadd.f32 0.0, %v742
        %744 = vmatprep.mubr.bf16.mxu0 0
        %745 = vmatmul.mubr.bf16.gmra.mrb[0].mxu0 %v381
        %v746 = vpop.f32.mrb[0].mxu0
        %v747 = vadd.f32 0.0, %v746
        %v748 = vpop.f32.mrb[0].mxu0
        %v749 = vadd.f32 0.0, %v748
        %v750 = vpop.f32.mrb[0].mxu0
        %v751 = vadd.f32 0.0, %v750
        %v752 = vpop.f32.mrb[0].mxu0
        %v753 = vadd.f32 0.0, %v752
        %754 = vmatprep.mubr.bf16.mxu0 0
        %755 = vmatmul.mubr.bf16.gmra.mrb[0].mxu0 %v384
        %v756 = vpop.f32.mrb[0].mxu0
        %v757 = vadd.f32 0.0, %v756
        %v758 = vpop.f32.mrb[0].mxu0
        %v759 = vadd.f32 0.0, %v758
        %v760 = vpop.f32.mrb[0].mxu0
        %v761 = vadd.f32 0.0, %v760
        %v762 = vpop.f32.mrb[0].mxu0
        %v763 = vadd.f32 0.0, %v762
        %764 = vmatprep.mubr.bf16.mxu0 0
        %765 = vmatmul.mubr.bf16.gmra.mrb[0].mxu0 %v387
        %v766 = vpop.f32.mrb[0].mxu0
        %v767 = vadd.f32 0.0, %v766
        %v768 = vpop.f32.mrb[0].mxu0
        %v769 = vadd.f32 0.0, %v768
        %v770 = vpop.f32.mrb[0].mxu0
        %v771 = vadd.f32 0.0, %v770
        %v772 = vpop.f32.mrb[0].mxu0
        %v773 = vadd.f32 0.0, %v772
        %774 = vdwg.mxu0
        %v775 = vpack.c.bf16 %v428, %v424
        %v776 = vpack.c.bf16 %v430, %v426
        %v777 = vpack.c.bf16 %v621, %v617
        %v778 = vpack.c.bf16 %v623, %v619
        %v779 = vpack.c.bf16 %v438, %v434
        %v780 = vpack.c.bf16 %v440, %v436
        %v781 = vpack.c.bf16 %v631, %v627
        %v782 = vpack.c.bf16 %v633, %v629
        %v783 = vpack.c.bf16 %v448, %v444
        %v784 = vpack.c.bf16 %v450, %v446
        %v785 = vpack.c.bf16 %v641, %v637
        %v786 = vpack.c.bf16 %v643, %v639
        %v787 = vpack.c.bf16 %v458, %v454
        %v788 = vpack.c.bf16 %v460, %v456
        %v789 = vpack.c.bf16 %v651, %v647
        %v790 = vpack.c.bf16 %v653, %v649
        %v791 = vpack.c.bf16 %v468, %v464
        %v792 = vpack.c.bf16 %v470, %v466
        %v793 = vpack.c.bf16 %v661, %v657
        %v794 = vpack.c.bf16 %v663, %v659
        %v795 = vpack.c.bf16 %v478, %v474
        %v796 = vpack.c.bf16 %v480, %v476
        %v797 = vpack.c.bf16 %v671, %v667
        %v798 = vpack.c.bf16 %v673, %v669
        %v799 = vpack.c.bf16 %v488, %v484
        %v800 = vpack.c.bf16 %v490, %v486
        %v801 = vpack.c.bf16 %v681, %v677
        %v802 = vpack.c.bf16 %v683, %v679
        %v803 = vpack.c.bf16 %v498, %v494
        %v804 = vpack.c.bf16 %v500, %v496
        %v805 = vpack.c.bf16 %v691, %v687
        %v806 = vpack.c.bf16 %v693, %v689
        %v807 = vpack.c.bf16 %v508, %v504
        %v808 = vpack.c.bf16 %v510, %v506
        %v809 = vpack.c.bf16 %v701, %v697
        %v810 = vpack.c.bf16 %v703, %v699
        %v811 = vpack.c.bf16 %v518, %v514
        %v812 = vpack.c.bf16 %v520, %v516
        %v813 = vpack.c.bf16 %v711, %v707
        %v814 = vpack.c.bf16 %v713, %v709
        %v815 = vpack.c.bf16 %v528, %v524
        %v816 = vpack.c.bf16 %v530, %v526
        %v817 = vpack.c.bf16 %v721, %v717
        %v818 = vpack.c.bf16 %v723, %v719
        %v819 = vpack.c.bf16 %v538, %v534
        %v820 = vpack.c.bf16 %v540, %v536
        %v821 = vpack.c.bf16 %v731, %v727
        %v822 = vpack.c.bf16 %v733, %v729
        %v823 = vpack.c.bf16 %v548, %v544
        %v824 = vpack.c.bf16 %v550, %v546
        %v825 = vpack.c.bf16 %v741, %v737
        %v826 = vpack.c.bf16 %v743, %v739
        %v827 = vpack.c.bf16 %v558, %v554
        %v828 = vpack.c.bf16 %v560, %v556
        %v829 = vpack.c.bf16 %v751, %v747
        %v830 = vpack.c.bf16 %v753, %v749
        %v831 = vpack.c.bf16 %v568, %v564
        %v832 = vpack.c.bf16 %v570, %v566
        %v833 = vpack.c.bf16 %v761, %v757
        %v834 = vpack.c.bf16 %v763, %v759
        %v835 = vpack.c.bf16 %v578, %v574
        %v836 = vpack.c.bf16 %v580, %v576
        %v837 = vpack.c.bf16 %v771, %v767
        %v838 = vpack.c.bf16 %v773, %v769
        %v903 = vunpack.c.l.b16 %v775
        %v904 = vunpack.c.l.b16 %v776
        %v905 = vunpack.c.l.b16 %v777
        %v906 = vunpack.c.l.b16 %v778
        %v907 = vunpack.c.h.b16 %v775
        %v908 = vunpack.c.h.b16 %v776
        %v909 = vunpack.c.h.b16 %v777
        %v910 = vunpack.c.h.b16 %v778
        %v911 = vunpack.c.l.b16 %v779
        %v912 = vunpack.c.l.b16 %v780
        %v913 = vunpack.c.l.b16 %v781
        %v914 = vunpack.c.l.b16 %v782
        %v915 = vunpack.c.h.b16 %v779
        %v916 = vunpack.c.h.b16 %v780
        %v917 = vunpack.c.h.b16 %v781
        %v918 = vunpack.c.h.b16 %v782
        %v919 = vunpack.c.l.b16 %v783
        %v920 = vunpack.c.l.b16 %v784
        %v921 = vunpack.c.l.b16 %v785
        %v922 = vunpack.c.l.b16 %v786
        %v923 = vunpack.c.h.b16 %v783
        %v924 = vunpack.c.h.b16 %v784
        %v925 = vunpack.c.h.b16 %v785
        %v926 = vunpack.c.h.b16 %v786
        %v927 = vunpack.c.l.b16 %v787
        %v928 = vunpack.c.l.b16 %v788
        %v929 = vunpack.c.l.b16 %v789
        %v930 = vunpack.c.l.b16 %v790
        %v931 = vunpack.c.h.b16 %v787
        %v932 = vunpack.c.h.b16 %v788
        %v933 = vunpack.c.h.b16 %v789
        %v934 = vunpack.c.h.b16 %v790
        %v935 = vunpack.c.l.b16 %v791
        %v936 = vunpack.c.l.b16 %v792
        %v937 = vunpack.c.l.b16 %v793
        %v938 = vunpack.c.l.b16 %v794
        %v939 = vunpack.c.h.b16 %v791
        %v940 = vunpack.c.h.b16 %v792
        %v941 = vunpack.c.h.b16 %v793
        %v942 = vunpack.c.h.b16 %v794
        %v943 = vunpack.c.l.b16 %v795
        %v944 = vunpack.c.l.b16 %v796
        %v945 = vunpack.c.l.b16 %v797
        %v946 = vunpack.c.l.b16 %v798
        %v947 = vunpack.c.h.b16 %v795
        %v948 = vunpack.c.h.b16 %v796
        %v949 = vunpack.c.h.b16 %v797
        %v950 = vunpack.c.h.b16 %v798
        %v951 = vunpack.c.l.b16 %v799
        %v952 = vunpack.c.l.b16 %v800
        %v953 = vunpack.c.l.b16 %v801
        %v954 = vunpack.c.l.b16 %v802
        %v955 = vunpack.c.h.b16 %v799
        %v956 = vunpack.c.h.b16 %v800
        %v957 = vunpack.c.h.b16 %v801
        %v958 = vunpack.c.h.b16 %v802
        %v959 = vunpack.c.l.b16 %v803
        %v960 = vunpack.c.l.b16 %v804
        %v961 = vunpack.c.l.b16 %v805
        %v962 = vunpack.c.l.b16 %v806
        %v963 = vunpack.c.h.b16 %v803
        %v964 = vunpack.c.h.b16 %v804
        %v965 = vunpack.c.h.b16 %v805
        %v966 = vunpack.c.h.b16 %v806
        %v967 = vunpack.c.l.b16 %v807
        %v968 = vunpack.c.l.b16 %v808
        %v969 = vunpack.c.l.b16 %v809
        %v970 = vunpack.c.l.b16 %v810
        %v971 = vunpack.c.h.b16 %v807
        %v972 = vunpack.c.h.b16 %v808
        %v973 = vunpack.c.h.b16 %v809
        %v974 = vunpack.c.h.b16 %v810
        %v975 = vunpack.c.l.b16 %v811
        %v976 = vunpack.c.l.b16 %v812
        %v977 = vunpack.c.l.b16 %v813
        %v978 = vunpack.c.l.b16 %v814
        %v979 = vunpack.c.h.b16 %v811
        %v980 = vunpack.c.h.b16 %v812
        %v981 = vunpack.c.h.b16 %v813
        %v982 = vunpack.c.h.b16 %v814
        %v983 = vunpack.c.l.b16 %v815
        %v984 = vunpack.c.l.b16 %v816
        %v985 = vunpack.c.l.b16 %v817
        %v986 = vunpack.c.l.b16 %v818
        %v987 = vunpack.c.h.b16 %v815
        %v988 = vunpack.c.h.b16 %v816
        %v989 = vunpack.c.h.b16 %v817
        %v990 = vunpack.c.h.b16 %v818
        %v991 = vunpack.c.l.b16 %v819
        %v992 = vunpack.c.l.b16 %v820
        %v993 = vunpack.c.l.b16 %v821
        %v994 = vunpack.c.l.b16 %v822
        %v995 = vunpack.c.h.b16 %v819
        %v996 = vunpack.c.h.b16 %v820
        %v997 = vunpack.c.h.b16 %v821
        %v998 = vunpack.c.h.b16 %v822
        %v999 = vunpack.c.l.b16 %v823
        %v1000 = vunpack.c.l.b16 %v824
        %v1001 = vunpack.c.l.b16 %v825
        %v1002 = vunpack.c.l.b16 %v826
        %v1003 = vunpack.c.h.b16 %v823
        %v1004 = vunpack.c.h.b16 %v824
        %v1005 = vunpack.c.h.b16 %v825
        %v1006 = vunpack.c.h.b16 %v826
        %v1007 = vunpack.c.l.b16 %v827
        %v1008 = vunpack.c.l.b16 %v828
        %v1009 = vunpack.c.l.b16 %v829
        %v1010 = vunpack.c.l.b16 %v830
        %v1011 = vunpack.c.h.b16 %v827
        %v1012 = vunpack.c.h.b16 %v828
        %v1013 = vunpack.c.h.b16 %v829
        %v1014 = vunpack.c.h.b16 %v830
        %v1015 = vunpack.c.l.b16 %v831
        %v1016 = vunpack.c.l.b16 %v832
        %v1017 = vunpack.c.l.b16 %v833
        %v1018 = vunpack.c.l.b16 %v834
        %v1019 = vunpack.c.h.b16 %v831
        %v1020 = vunpack.c.h.b16 %v832
        %v1021 = vunpack.c.h.b16 %v833
        %v1022 = vunpack.c.h.b16 %v834
        %v1023 = vunpack.c.l.b16 %v835
        %v1024 = vunpack.c.l.b16 %v836
        %v1025 = vunpack.c.l.b16 %v837
        %v1026 = vunpack.c.l.b16 %v838
        %v1027 = vunpack.c.h.b16 %v835
        %v1028 = vunpack.c.h.b16 %v836
        %v1029 = vunpack.c.h.b16 %v837
        %v1030 = vunpack.c.h.b16 %v838
        %v1031 = vpack.c.b16 %v904, %v903
        %v1032 = vpack.c.b16 %v906, %v905
        %v1033 = vpack.c.b16 %v908, %v907
        %v1034 = vpack.c.b16 %v910, %v909
        %v1035 = vpack.c.b16 %v912, %v911
        %v1036 = vpack.c.b16 %v914, %v913
        %v1037 = vpack.c.b16 %v916, %v915
        %v1038 = vpack.c.b16 %v918, %v917
        %v1039 = vpack.c.b16 %v920, %v919
        %v1040 = vpack.c.b16 %v922, %v921
        %v1041 = vpack.c.b16 %v924, %v923
        %v1042 = vpack.c.b16 %v926, %v925
        %v1043 = vpack.c.b16 %v928, %v927
        %v1044 = vpack.c.b16 %v930, %v929
        %v1045 = vpack.c.b16 %v932, %v931
        %v1046 = vpack.c.b16 %v934, %v933
        %v1047 = vpack.c.b16 %v936, %v935
        %v1048 = vpack.c.b16 %v938, %v937
        %v1049 = vpack.c.b16 %v940, %v939
        %v1050 = vpack.c.b16 %v942, %v941
        %v1051 = vpack.c.b16 %v944, %v943
        %v1052 = vpack.c.b16 %v946, %v945
        %v1053 = vpack.c.b16 %v948, %v947
        %v1054 = vpack.c.b16 %v950, %v949
        %v1055 = vpack.c.b16 %v952, %v951
        %v1056 = vpack.c.b16 %v954, %v953
        %v1057 = vpack.c.b16 %v956, %v955
        %v1058 = vpack.c.b16 %v958, %v957
        %v1059 = vpack.c.b16 %v960, %v959
        %v1060 = vpack.c.b16 %v962, %v961
        %v1061 = vpack.c.b16 %v964, %v963
        %v1062 = vpack.c.b16 %v966, %v965
        %v1063 = vpack.c.b16 %v968, %v967
        %v1064 = vpack.c.b16 %v970, %v969
        %v1065 = vpack.c.b16 %v972, %v971
        %v1066 = vpack.c.b16 %v974, %v973
        %v1067 = vpack.c.b16 %v976, %v975
        %v1068 = vpack.c.b16 %v978, %v977
        %v1069 = vpack.c.b16 %v980, %v979
        %v1070 = vpack.c.b16 %v982, %v981
        %v1071 = vpack.c.b16 %v984, %v983
        %v1072 = vpack.c.b16 %v986, %v985
        %v1073 = vpack.c.b16 %v988, %v987
        %v1074 = vpack.c.b16 %v990, %v989
        %v1075 = vpack.c.b16 %v992, %v991
        %v1076 = vpack.c.b16 %v994, %v993
        %v1077 = vpack.c.b16 %v996, %v995
        %v1078 = vpack.c.b16 %v998, %v997
        %v1079 = vpack.c.b16 %v1000, %v999
        %v1080 = vpack.c.b16 %v1002, %v1001
        %v1081 = vpack.c.b16 %v1004, %v1003
        %v1082 = vpack.c.b16 %v1006, %v1005
        %v1083 = vpack.c.b16 %v1008, %v1007
        %v1084 = vpack.c.b16 %v1010, %v1009
        %v1085 = vpack.c.b16 %v1012, %v1011
        %v1086 = vpack.c.b16 %v1014, %v1013
        %v1087 = vpack.c.b16 %v1016, %v1015
        %v1088 = vpack.c.b16 %v1018, %v1017
        %v1089 = vpack.c.b16 %v1020, %v1019
        %v1090 = vpack.c.b16 %v1022, %v1021
        %v1091 = vpack.c.b16 %v1024, %v1023
        %v1092 = vpack.c.b16 %v1026, %v1025
        %v1093 = vpack.c.b16 %v1028, %v1027
        %v1094 = vpack.c.b16 %v1030, %v1029
        %1159 = vst [vmem:[%s193] sm:$0xff] %v1031
        %1160 = vst [vmem:[%s193 + $0x8] sm:$0xff] %v1032
        %1161 = vst [vmem:[%s193 + $0x10] sm:$0xff] %v1033
        %1162 = vst [vmem:[%s193 + $0x18] sm:$0xff] %v1034
        %1163 = vst [vmem:[%s193 + $0x20] sm:$0xff] %v1035
        %1164 = vst [vmem:[%s193 + $0x28] sm:$0xff] %v1036
        %1165 = vst [vmem:[%s193 + $0x30] sm:$0xff] %v1037
        %1166 = vst [vmem:[%s193 + $0x38] sm:$0xff] %v1038
        %1167 = vst [vmem:[%s193 + $0x40] sm:$0xff] %v1039
        %1168 = vst [vmem:[%s193 + $0x48] sm:$0xff] %v1040
        %1169 = vst [vmem:[%s193 + $0x50] sm:$0xff] %v1041
        %1170 = vst [vmem:[%s193 + $0x58] sm:$0xff] %v1042
        %1171 = vst [vmem:[%s193 + $0x60] sm:$0xff] %v1043
        %1172 = vst [vmem:[%s193 + $0x68] sm:$0xff] %v1044
        %1173 = vst [vmem:[%s193 + $0x70] sm:$0xff] %v1045
        %1174 = vst [vmem:[%s193 + $0x78] sm:$0xff] %v1046
        %1175 = vst [vmem:[%s193 + $0x80] sm:$0xff] %v1047
        %1176 = vst [vmem:[%s193 + $0x88] sm:$0xff] %v1048
        %1177 = vst [vmem:[%s193 + $0x90] sm:$0xff] %v1049
        %1178 = vst [vmem:[%s193 + $0x98] sm:$0xff] %v1050
        %1179 = vst [vmem:[%s193 + $0xa0] sm:$0xff] %v1051
        %1180 = vst [vmem:[%s193 + $0xa8] sm:$0xff] %v1052
        %1181 = vst [vmem:[%s193 + $0xb0] sm:$0xff] %v1053
        %1182 = vst [vmem:[%s193 + $0xb8] sm:$0xff] %v1054
        %1183 = vst [vmem:[%s193 + $0xc0] sm:$0xff] %v1055
        %1184 = vst [vmem:[%s193 + $0xc8] sm:$0xff] %v1056
        %1185 = vst [vmem:[%s193 + $0xd0] sm:$0xff] %v1057
        %1186 = vst [vmem:[%s193 + $0xd8] sm:$0xff] %v1058
        %1187 = vst [vmem:[%s193 + $0xe0] sm:$0xff] %v1059
        %1188 = vst [vmem:[%s193 + $0xe8] sm:$0xff] %v1060
        %1189 = vst [vmem:[%s193 + $0xf0] sm:$0xff] %v1061
        %1190 = vst [vmem:[%s193 + $0xf8] sm:$0xff] %v1062
        %1191 = vst [vmem:[%s193 + $0x100] sm:$0xff] %v1063
        %1192 = vst [vmem:[%s193 + $0x108] sm:$0xff] %v1064
        %1193 = vst [vmem:[%s193 + $0x110] sm:$0xff] %v1065
        %1194 = vst [vmem:[%s193 + $0x118] sm:$0xff] %v1066
        %1195 = vst [vmem:[%s193 + $0x120] sm:$0xff] %v1067
        %1196 = vst [vmem:[%s193 + $0x128] sm:$0xff] %v1068
        %1197 = vst [vmem:[%s193 + $0x130] sm:$0xff] %v1069
        %1198 = vst [vmem:[%s193 + $0x138] sm:$0xff] %v1070
        %1199 = vst [vmem:[%s193 + $0x140] sm:$0xff] %v1071
        %1200 = vst [vmem:[%s193 + $0x148] sm:$0xff] %v1072
        %1201 = vst [vmem:[%s193 + $0x150] sm:$0xff] %v1073
        %1202 = vst [vmem:[%s193 + $0x158] sm:$0xff] %v1074
        %1203 = vst [vmem:[%s193 + $0x160] sm:$0xff] %v1075
        %1204 = vst [vmem:[%s193 + $0x168] sm:$0xff] %v1076
        %1205 = vst [vmem:[%s193 + $0x170] sm:$0xff] %v1077
        %1206 = vst [vmem:[%s193 + $0x178] sm:$0xff] %v1078
        %1207 = vst [vmem:[%s193 + $0x180] sm:$0xff] %v1079
        %1208 = vst [vmem:[%s193 + $0x188] sm:$0xff] %v1080
        %1209 = vst [vmem:[%s193 + $0x190] sm:$0xff] %v1081
        %1210 = vst [vmem:[%s193 + $0x198] sm:$0xff] %v1082
        %1211 = vst [vmem:[%s193 + $0x1a0] sm:$0xff] %v1083
        %1212 = vst [vmem:[%s193 + $0x1a8] sm:$0xff] %v1084
        %1213 = vst [vmem:[%s193 + $0x1b0] sm:$0xff] %v1085
        %1214 = vst [vmem:[%s193 + $0x1b8] sm:$0xff] %v1086
        %1215 = vst [vmem:[%s193 + $0x1c0] sm:$0xff] %v1087
        %1216 = vst [vmem:[%s193 + $0x1c8] sm:$0xff] %v1088
        %1217 = vst [vmem:[%s193 + $0x1d0] sm:$0xff] %v1089
        %1218 = vst [vmem:[%s193 + $0x1d8] sm:$0xff] %v1090
        %1219 = vst [vmem:[%s193 + $0x1e0] sm:$0xff] %v1091
        %1220 = vst [vmem:[%s193 + $0x1e8] sm:$0xff] %v1092
        %1221 = vst [vmem:[%s193 + $0x1f0] sm:$0xff] %v1093
        %1222 = vst [vmem:[%s193 + $0x1f8] sm:$0xff] %v1094
        %s1223 = sand.u32 %s87, 1
        %s1224 = sand.u32 %s87, 1
        %s1225 = smul.addr %s1224, 512
        %s1226 = scalar_lea.vmem [#allocation3], %s1225
        // Predicated region
        $region52: #{model_forward.5} parent=46 // pred_check
          %p1227 = pneg %p97
        $region53: #{model_forward.5} parent=46 // pred_check_branch
          %1229 = sbr.rel (%p1227) target = $region55
        $region54: #{model_forward.5} parent=46 // pred_region
          %s1230 = smul.u32 32, %s17
          %s1231 = smul.u32 4, %s18
          %s1232 = smul.addr %s1230, 60
          %s1233 = sadd.s32 %s1231, %s1232
          %s1234 = smul.addr %s1233, 4
          %s1235 = scalar_lea.vmem %s2, %s1234
          // Predicated region
          $region56: #{model_forward.5} parent=54 // pred_check
            _
          $region57: #{model_forward.5} parent=54 // pred_check_branch
            %1237 = sbr.rel (0) target = $region59
          $region58: #{model_forward.5} parent=54 // pred_region
            // Predicated region
            $region60: #{model_forward.5} parent=58 // pred_check
              _
            $region61: #{model_forward.5} parent=58 // pred_check_branch
              %1239 = sbr.rel (0) target = $region63
            $region62: #{model_forward.5} parent=58 // pred_region
              loop: start=0, step=1, limit=1
              $region64: #{model_forward.5} parent=62 // loop_pre_header
                _
              $region65: #{model_forward.5} parent=62 // loop_header
                %s1241 = sphi 0, %s1245
                %p1242 = scmp.ge.s32.totalorder %s1241, 1
                %s1246 = sphi %s1226, %s1226
                %s1247 = sphi %s1235, %s1235
              $region66: #{model_forward.5} parent=62 // loop_header_branch
                %1244 = sbr.rel (%p1242) target = $region70
              $region67: #{model_forward.5} parent=62 // loop_body
                %v1248 = vld [vmem:[%s1246] sm:$0xff]
                %1249 = vst [vmem:[%s1247] sm:$0xff] %v1248
                %v1250 = vld [vmem:[%s1246 + $0x8] sm:$0xff]
                %1251 = vst [vmem:[%s1247 + $0x8] sm:$0xff] %v1250
                %v1252 = vld [vmem:[%s1246 + $0x10] sm:$0xff]
                %1253 = vst [vmem:[%s1247 + $0xf0] sm:$0xff] %v1252
                %v1254 = vld [vmem:[%s1246 + $0x18] sm:$0xff]
                %1255 = vst [vmem:[%s1247 + $0xf8] sm:$0xff] %v1254
                %v1256 = vld [vmem:[%s1246 + $0x20] sm:$0xff]
                %1257 = vst [vmem:[%s1247 + $0x1e0] sm:$0xff] %v1256
                %v1258 = vld [vmem:[%s1246 + $0x28] sm:$0xff]
                %1259 = vst [vmem:[%s1247 + $0x1e8] sm:$0xff] %v1258
                %v1260 = vld [vmem:[%s1246 + $0x30] sm:$0xff]
                %1261 = vst [vmem:[%s1247 + $0x2d0] sm:$0xff] %v1260
                %v1262 = vld [vmem:[%s1246 + $0x38] sm:$0xff]
                %1263 = vst [vmem:[%s1247 + $0x2d8] sm:$0xff] %v1262
                %v1264 = vld [vmem:[%s1246 + $0x40] sm:$0xff]
                %1265 = vst [vmem:[%s1247 + $0x3c0] sm:$0xff] %v1264
                %v1266 = vld [vmem:[%s1246 + $0x48] sm:$0xff]
                %1267 = vst [vmem:[%s1247 + $0x3c8] sm:$0xff] %v1266
                %v1268 = vld [vmem:[%s1246 + $0x50] sm:$0xff]
                %1269 = vst [vmem:[%s1247 + $0x4b0] sm:$0xff] %v1268
                %v1270 = vld [vmem:[%s1246 + $0x58] sm:$0xff]
                %1271 = vst [vmem:[%s1247 + $0x4b8] sm:$0xff] %v1270
                %v1272 = vld [vmem:[%s1246 + $0x60] sm:$0xff]
                %1273 = vst [vmem:[%s1247 + $0x5a0] sm:$0xff] %v1272
                %v1274 = vld [vmem:[%s1246 + $0x68] sm:$0xff]
                %1275 = vst [vmem:[%s1247 + $0x5a8] sm:$0xff] %v1274
                %v1276 = vld [vmem:[%s1246 + $0x70] sm:$0xff]
                %1277 = vst [vmem:[%s1247 + $0x690] sm:$0xff] %v1276
                %v1278 = vld [vmem:[%s1246 + $0x78] sm:$0xff]
                %1279 = vst [vmem:[%s1247 + $0x698] sm:$0xff] %v1278
                %v1280 = vld [vmem:[%s1246 + $0x80] sm:$0xff]
                %1281 = vst [vmem:[%s1247 + $0x780] sm:$0xff] %v1280
                %v1282 = vld [vmem:[%s1246 + $0x88] sm:$0xff]
                %1283 = vst [vmem:[%s1247 + $0x788] sm:$0xff] %v1282
                %v1284 = vld [vmem:[%s1246 + $0x90] sm:$0xff]
                %1285 = vst [vmem:[%s1247 + $0x870] sm:$0xff] %v1284
                %v1286 = vld [vmem:[%s1246 + $0x98] sm:$0xff]
                %1287 = vst [vmem:[%s1247 + $0x878] sm:$0xff] %v1286
                %v1288 = vld [vmem:[%s1246 + $0xa0] sm:$0xff]
                %1289 = vst [vmem:[%s1247 + $0x960] sm:$0xff] %v1288
                %v1290 = vld [vmem:[%s1246 + $0xa8] sm:$0xff]
                %1291 = vst [vmem:[%s1247 + $0x968] sm:$0xff] %v1290
                %v1292 = vld [vmem:[%s1246 + $0xb0] sm:$0xff]
                %1293 = vst [vmem:[%s1247 + $0xa50] sm:$0xff] %v1292
                %v1294 = vld [vmem:[%s1246 + $0xb8] sm:$0xff]
                %1295 = vst [vmem:[%s1247 + $0xa58] sm:$0xff] %v1294
                %v1296 = vld [vmem:[%s1246 + $0xc0] sm:$0xff]
                %1297 = vst [vmem:[%s1247 + $0xb40] sm:$0xff] %v1296
                %v1298 = vld [vmem:[%s1246 + $0xc8] sm:$0xff]
                %1299 = vst [vmem:[%s1247 + $0xb48] sm:$0xff] %v1298
                %v1300 = vld [vmem:[%s1246 + $0xd0] sm:$0xff]
                %1301 = vst [vmem:[%s1247 + $0xc30] sm:$0xff] %v1300
                %v1302 = vld [vmem:[%s1246 + $0xd8] sm:$0xff]
                %1303 = vst [vmem:[%s1247 + $0xc38] sm:$0xff] %v1302
                %v1304 = vld [vmem:[%s1246 + $0xe0] sm:$0xff]
                %1305 = vst [vmem:[%s1247 + $0xd20] sm:$0xff] %v1304
                %v1306 = vld [vmem:[%s1246 + $0xe8] sm:$0xff]
                %1307 = vst [vmem:[%s1247 + $0xd28] sm:$0xff] %v1306
                %v1308 = vld [vmem:[%s1246 + $0xf0] sm:$0xff]
                %1309 = vst [vmem:[%s1247 + $0xe10] sm:$0xff] %v1308
                %v1310 = vld [vmem:[%s1246 + $0xf8] sm:$0xff]
                %1311 = vst [vmem:[%s1247 + $0xe18] sm:$0xff] %v1310
                %v1312 = vld [vmem:[%s1246 + $0x100] sm:$0xff]
                %1313 = vst [vmem:[%s1247 + $0xf00] sm:$0xff] %v1312
                %v1314 = vld [vmem:[%s1246 + $0x108] sm:$0xff]
                %1315 = vst [vmem:[%s1247 + $0xf08] sm:$0xff] %v1314
                %v1316 = vld [vmem:[%s1246 + $0x110] sm:$0xff]
                %1317 = vst [vmem:[%s1247 + $0xff0] sm:$0xff] %v1316
                %v1318 = vld [vmem:[%s1246 + $0x118] sm:$0xff]
                %1319 = vst [vmem:[%s1247 + $0xff8] sm:$0xff] %v1318
                %v1320 = vld [vmem:[%s1246 + $0x120] sm:$0xff]
                %1321 = vst [vmem:[%s1247 + $0x10e0] sm:$0xff] %v1320
                %v1322 = vld [vmem:[%s1246 + $0x128] sm:$0xff]
                %1323 = vst [vmem:[%s1247 + $0x10e8] sm:$0xff] %v1322
                %v1324 = vld [vmem:[%s1246 + $0x130] sm:$0xff]
                %1325 = vst [vmem:[%s1247 + $0x11d0] sm:$0xff] %v1324
                %v1326 = vld [vmem:[%s1246 + $0x138] sm:$0xff]
                %1327 = vst [vmem:[%s1247 + $0x11d8] sm:$0xff] %v1326
                %v1328 = vld [vmem:[%s1246 + $0x140] sm:$0xff]
                %1329 = vst [vmem:[%s1247 + $0x12c0] sm:$0xff] %v1328
                %v1330 = vld [vmem:[%s1246 + $0x148] sm:$0xff]
                %1331 = vst [vmem:[%s1247 + $0x12c8] sm:$0xff] %v1330
                %v1332 = vld [vmem:[%s1246 + $0x150] sm:$0xff]
                %1333 = vst [vmem:[%s1247 + $0x13b0] sm:$0xff] %v1332
                %v1334 = vld [vmem:[%s1246 + $0x158] sm:$0xff]
                %1335 = vst [vmem:[%s1247 + $0x13b8] sm:$0xff] %v1334
                %v1336 = vld [vmem:[%s1246 + $0x160] sm:$0xff]
                %1337 = vst [vmem:[%s1247 + $0x14a0] sm:$0xff] %v1336
                %v1338 = vld [vmem:[%s1246 + $0x168] sm:$0xff]
                %1339 = vst [vmem:[%s1247 + $0x14a8] sm:$0xff] %v1338
                %v1340 = vld [vmem:[%s1246 + $0x170] sm:$0xff]
                %1341 = vst [vmem:[%s1247 + $0x1590] sm:$0xff] %v1340
                %v1342 = vld [vmem:[%s1246 + $0x178] sm:$0xff]
                %1343 = vst [vmem:[%s1247 + $0x1598] sm:$0xff] %v1342
                %v1344 = vld [vmem:[%s1246 + $0x180] sm:$0xff]
                %1345 = vst [vmem:[%s1247 + $0x1680] sm:$0xff] %v1344
                %v1346 = vld [vmem:[%s1246 + $0x188] sm:$0xff]
                %1347 = vst [vmem:[%s1247 + $0x1688] sm:$0xff] %v1346
                %v1348 = vld [vmem:[%s1246 + $0x190] sm:$0xff]
                %1349 = vst [vmem:[%s1247 + $0x1770] sm:$0xff] %v1348
                %v1350 = vld [vmem:[%s1246 + $0x198] sm:$0xff]
                %1351 = vst [vmem:[%s1247 + $0x1778] sm:$0xff] %v1350
                %v1352 = vld [vmem:[%s1246 + $0x1a0] sm:$0xff]
                %1353 = vst [vmem:[%s1247 + $0x1860] sm:$0xff] %v1352
                %v1354 = vld [vmem:[%s1246 + $0x1a8] sm:$0xff]
                %1355 = vst [vmem:[%s1247 + $0x1868] sm:$0xff] %v1354
                %v1356 = vld [vmem:[%s1246 + $0x1b0] sm:$0xff]
                %1357 = vst [vmem:[%s1247 + $0x1950] sm:$0xff] %v1356
                %v1358 = vld [vmem:[%s1246 + $0x1b8] sm:$0xff]
                %1359 = vst [vmem:[%s1247 + $0x1958] sm:$0xff] %v1358
                %v1360 = vld [vmem:[%s1246 + $0x1c0] sm:$0xff]
                %1361 = vst [vmem:[%s1247 + $0x1a40] sm:$0xff] %v1360
                %v1362 = vld [vmem:[%s1246 + $0x1c8] sm:$0xff]
                %1363 = vst [vmem:[%s1247 + $0x1a48] sm:$0xff] %v1362
                %v1364 = vld [vmem:[%s1246 + $0x1d0] sm:$0xff]
                %1365 = vst [vmem:[%s1247 + $0x1b30] sm:$0xff] %v1364
                %v1366 = vld [vmem:[%s1246 + $0x1d8] sm:$0xff]
                %1367 = vst [vmem:[%s1247 + $0x1b38] sm:$0xff] %v1366
                %v1368 = vld [vmem:[%s1246 + $0x1e0] sm:$0xff]
                %1369 = vst [vmem:[%s1247 + $0x1c20] sm:$0xff] %v1368
                %v1370 = vld [vmem:[%s1246 + $0x1e8] sm:$0xff]
                %1371 = vst [vmem:[%s1247 + $0x1c28] sm:$0xff] %v1370
                %v1372 = vld [vmem:[%s1246 + $0x1f0] sm:$0xff]
                %1373 = vst [vmem:[%s1247 + $0x1d10] sm:$0xff] %v1372
                %v1374 = vld [vmem:[%s1246 + $0x1f8] sm:$0xff]
                %1375 = vst [vmem:[%s1247 + $0x1d18] sm:$0xff] %v1374
              $region68: #{model_forward.5} parent=62 // loop_footer
                %s1245 = sadd.s32 1, %s1241
              $region69: #{model_forward.5} parent=62 // loop_footer_branch
                %1240 = sbr.rel target = $region65
              $region70: #{model_forward.5} parent=62 // loop_exit
                _
            $region63: #{model_forward.5} parent=58 // pred_fallthru
              _
            // Predicated region
            $region71: #{model_forward.5} parent=58 // pred_check
              _
            $region72: #{model_forward.5} parent=58 // pred_check_branch
              %1377 = sbr.rel target = $region74
            $region73: #{model_forward.5} parent=58 // pred_region
              _
            $region74: #{model_forward.5} parent=58 // pred_fallthru
              _
          $region59: #{model_forward.5} parent=54 // pred_fallthru
            _
          %1378 = vnop
        $region55: #{model_forward.5} parent=46 // pred_fallthru
          _
      $region47: #{model_forward.5} parent=5 // pred_fallthru
        _
      %p1379 = scmp.le.s32.totalorder 2, %s8
      // Predicated region
      $region75: #{model_forward.5} parent=5 // pred_check
        %p1380 = pneg %p1379
      $region76: #{model_forward.5} parent=5 // pred_check_branch
        %1382 = sbr.rel (%p1380) target = $region78
      $region77: #{model_forward.5} parent=5 // pred_region
        %s1383 = ssub.s32 %s8, 2
        // Predicated region
        $region79: #{model_forward.5} parent=77 // pred_check
          %p1384 = pneg %p103
        $region80: #{model_forward.5} parent=77 // pred_check_branch
          %1386 = sbr.rel (%p1384) target = $region82
        $region81: #{model_forward.5} parent=77 // pred_region
          %s1387 = sand.u32 %s88, 1
          %s1388 = sand.u32 %s88, 1
          %s1389 = smul.addr %s1388, 512
          %s1390 = scalar_lea.vmem [#allocation3], %s1389
        $region82: #{model_forward.5} parent=77 // pred_fallthru
          _
      $region78: #{model_forward.5} parent=5 // pred_fallthru
        _
    $region6: #{model_forward.5} parent=1 // loop_footer
      %s12 = sadd.s32 1, %s8
    $region7: #{model_forward.5} parent=1 // loop_footer_branch
      %7 = sbr.rel target = $region3
    $region8: #{model_forward.5} parent=1 // loop_exit
      _

// kernel: model_forward.6
$region0: #{model_forward.6}
  #allocation0 [shape = 'u32[]', space=smem, size = 0x4, offset = 0x4, fixed_abs, tag = 'smem constant byte address 0x4 - core index']
  #allocation1 [shape = 'u32[144,128]{1,0:T(1,128)}', space=vmem, size = 0x12000, scoped, tag = 'internal scratch']
  %s0 = inlined_call_operand.vmem [shape: f32[2,17,15,2,256], index: 0, kind: input, shape index: {}]
  %s1 = inlined_call_operand.vmem [shape: f32[2,8,15,256], index: 1, kind: output, shape index: {}]
  %s2 = sld [smem:[#allocation0]]
  $region37: #{model_forward.6} parent=0
    _
  %s4 = ssub.s32 1, %s2
  %s5 = scalar_select 0, %s4, %s2
  loop: start=0, step=1, limit=18
  $region2: #{model_forward.6} parent=0 // loop_pre_header
    _
  $region3: #{model_forward.6} parent=0 // loop_header
    %s7 = sphi 0, %s11
    %p8 = scmp.ge.s32.totalorder %s7, 18
    %s14 = sphi 0, %s26
    %s15 = sphi 0, %s22
    %s16 = sphi 0, %s14
    %s17 = sphi 0, %s15
    %s18 = sphi 0, %s16
    %s19 = sphi 0, %s17
    %s31 = sphi 0, %s33
    %s34 = sphi 0, %s31
    %s35 = sphi 0, %s34
    %s51 = sphi 0, %s35
    %s59 = sphi 0, %s61
    %s62 = sphi 0, %s59
    %s63 = sphi 0, %s62
    %s79 = sphi 0, %s63
  $region4: #{model_forward.6} parent=0 // loop_header_branch
    %10 = sbr.rel (%p8) target = $region8
  $region5: #{model_forward.6} parent=0 // loop_body
    %s12 = ssub.s32 %s7, 1
    %s13 = ssub.s32 %s7, 2
    %s20 = sadd.s32 1, %s15
    %p21 = scmp.ge.s32.totalorder %s20, 8
    %s22 = scalar_select %p21, 0, %s20
    %s23 = sadd.s32 1, %s14
    %s24 = scalar_select %p21, %s23, %s14
    %p25 = scmp.ge.s32.totalorder %s24, 2
    %s26 = scalar_select %p25, 0, %s24
    %s27 = ssub.s32 %s14, %s26
    %s28 = ssub.s32 %s15, %s22
    %s29 = sor.u32 %s27, %s28
    %p30 = scmp.eq.s32.totalorder %s29, 0
    %s32 = sadd.s32 %s31, 1
    %s33 = scalar_select %p30, %s31, %s32
    %p36 = pneg %p30
    %p37 = scmp.eq.s32.totalorder %s7, 15
    %p38 = por %p36, %p37
    %p39 = scmp.ne.s32.totalorder %s31, %s34
    %p40 = scmp.eq.s32.totalorder %s7, 0
    %p41 = por %p39, %p40
    %p42 = scmp.ne.s32.totalorder %s31, %s34
    %p43 = scmp.eq.s32.totalorder %s12, 15
    %p44 = por %p42, %p43
    %p45 = scmp.ne.s32.totalorder %s34, %s35
    %p46 = scmp.eq.s32.totalorder %s12, 0
    %p47 = por %p45, %p46
    %p48 = scmp.ne.s32.totalorder %s34, %s35
    %p49 = scmp.eq.s32.totalorder %s13, 15
    %p50 = por %p48, %p49
    %p52 = scmp.ne.s32.totalorder %s35, %s51
    %p53 = scmp.eq.s32.totalorder %s13, 0
    %p54 = por %p52, %p53
    %s55 = ssub.s32 %s14, %s26
    %s56 = ssub.s32 %s15, %s22
    %s57 = sor.u32 %s55, %s56
    %p58 = scmp.eq.s32.totalorder %s57, 0
    %s60 = sadd.s32 %s59, 1
    %s61 = scalar_select %p58, %s59, %s60
    %p64 = pneg %p58
    %p65 = scmp.eq.s32.totalorder %s7, 15
    %p66 = por %p64, %p65
    %p67 = scmp.ne.s32.totalorder %s59, %s62
    %p68 = scmp.eq.s32.totalorder %s7, 0
    %p69 = por %p67, %p68
    %p70 = scmp.ne.s32.totalorder %s59, %s62
    %p71 = scmp.eq.s32.totalorder %s12, 15
    %p72 = por %p70, %p71
    %p73 = scmp.ne.s32.totalorder %s62, %s63
    %p74 = scmp.eq.s32.totalorder %s12, 0
    %p75 = por %p73, %p74
    %p76 = scmp.ne.s32.totalorder %s62, %s63
    %p77 = scmp.eq.s32.totalorder %s13, 15
    %p78 = por %p76, %p77
    %p80 = scmp.ne.s32.totalorder %s63, %s79
    %p81 = scmp.eq.s32.totalorder %s13, 0
    %p82 = por %p80, %p81
    %p83 = scmp.le.s32.totalorder 1, %s7
    %p84 = scmp.lt.s32.totalorder %s7, 17
    %p85 = pnand %p83, %p84
    %p86 = pneg %p85
    // Predicated region
    $region9: #{model_forward.6} parent=5 // pred_check
      _
    $region10: #{model_forward.6} parent=5 // pred_check_branch
      %88 = sbr.rel (%p85) target = $region12
    $region11: #{model_forward.6} parent=5 // pred_region
      %s89 = ssub.s32 %s7, 1
    $region12: #{model_forward.6} parent=5 // pred_fallthru
      _
    %p90 = scmp.lt.s32.totalorder %s7, 16
    // Predicated region
    $region13: #{model_forward.6} parent=5 // pred_check
      %p91 = pneg %p90
    $region14: #{model_forward.6} parent=5 // pred_check_branch
      %93 = sbr.rel (%p91) target = $region16
    $region15: #{model_forward.6} parent=5 // pred_region
      // Predicated region
      $region17: #{model_forward.6} parent=15 // pred_check
        %p94 = pneg %p41
      $region18: #{model_forward.6} parent=15 // pred_check_branch
        %96 = sbr.rel (%p94) target = $region20
      $region19: #{model_forward.6} parent=15 // pred_region
        %s97 = smul.u32 2, %s15
        %s98 = ssub.s32 17, %s97
        %p99 = scmp.lt.s32.totalorder %s98, 2
        %s100 = scalar_select %p99, %s98, 2
        %s101 = smul.u32 32, %s100
        %s102 = smul.u32 %s101, 15
        %s103 = smul.u32 %s102, 2
        %p104 = scmp.lt.s32.totalorder %s14, 1
        %s105 = scalar_select %p104, %s14, 1
        %p106 = scmp.lt.s32.totalorder %s97, 16
        %s107 = scalar_select %p106, %s97, 16
        %s108 = smul.addr %s107, 30
        %s109 = smul.addr %s105, 510
        %s110 = sadd.s32 %s108, %s109
        %s111 = smul.addr %s110, 2
        %s112 = scalar_lea.vmem %s0, %s111
        %s113 = smul.u32 2, %s15
        %s114 = ssub.s32 17, %s113
        %p115 = scmp.lt.s32.totalorder %s114, 2
        %s116 = scalar_select %p115, %s114, 2
        %s117 = smul.u32 32, %s116
        %s118 = smul.u32 %s117, 15
        %s119 = smul.u32 %s118, 2
      $region20: #{model_forward.6} parent=15 // pred_fallthru
        _
    $region16: #{model_forward.6} parent=5 // pred_fallthru
      _
    %p120 = scmp.le.s32.totalorder 1, %s7
    %p121 = scmp.lt.s32.totalorder %s7, 17
    %p122 = pnand %p120, %p121
    %p123 = pneg %p122
    // Predicated region
    $region21: #{model_forward.6} parent=5 // pred_check
      _
    $region22: #{model_forward.6} parent=5 // pred_check_branch
      %125 = sbr.rel (%p122) target = $region24
    $region23: #{model_forward.6} parent=5 // pred_region
      %s126 = ssub.s32 %s7, 1
      %s127 = smul.u32 2, %s17
      %s128 = ssub.s32 17, %s127
      %p129 = scmp.lt.s32.totalorder %s128, 2
      %s130 = scalar_select %p129, %s128, 2
      %s131 = smul.u32 32, %s130
      %s132 = smul.u32 %s131, 15
      %s133 = smul.u32 %s132, 2
      %p134 = scmp.lt.s32.totalorder %s16, 1
      %s135 = scalar_select %p134, %s16, 1
      %p136 = scmp.lt.s32.totalorder %s127, 16
      %s137 = scalar_select %p136, %s127, 16
      %s138 = smul.addr %s137, 30
      %s139 = smul.addr %s135, 510
      %s140 = sadd.s32 %s138, %s139
      %s141 = smul.addr %s140, 2
      %s142 = scalar_lea.vmem %s0, %s141
      %p143 = pneg %p47
      %p144 = pneg %p44
      %p145 = pneg %p75
      %p146 = pneg %p72
      %p147 = scmp.lt.s32.totalorder %s16, 1
      %s148 = scalar_select %p147, %s16, 1
      %p149 = scmp.lt.s32.totalorder %s17, 7
      %s150 = scalar_select %p149, %s17, 7
      %s151 = smul.addr %s150, 4
      %s152 = smul.addr %s148, 32
      %s153 = sadd.s32 %s151, %s152
      %s154 = smul.addr %s153, 8
      %s155 = scalar_lea.vmem %s1, %s154
      %s156 = smul.u32 2, %s17
      %s157 = ssub.s32 17, %s156
      %p158 = scmp.lt.s32.totalorder %s157, 2
      %s159 = scalar_select %p158, %s157, 2
      %s160 = smul.u32 32, %s159
      %s161 = smul.u32 %s160, 15
      %s162 = smul.u32 %s161, 2
      %p163 = scmp.lt.s32.totalorder %s16, 1
      %s164 = scalar_select %p163, %s16, 1
      %p165 = scmp.lt.s32.totalorder %s156, 16
      %s166 = scalar_select %p165, %s156, 16
      %s167 = smul.addr %s166, 30
      %s168 = smul.addr %s164, 510
      %s169 = sadd.s32 %s167, %s168
      %s170 = smul.addr %s169, 2
      %s171 = scalar_lea.vmem %s0, %s170
      %s172 = smul.u32 2, %s17
      %s173 = ssub.s32 17, %s172
      %p174 = scmp.lt.s32.totalorder %s173, 2
      %s175 = scalar_select %p174, %s173, 2
      %s176 = smul.u32 32, %s175
      %s177 = smul.u32 %s176, 15
      %s178 = smul.u32 %s177, 2
      %p179 = scmp.lt.s32.totalorder %s16, 1
      %s180 = scalar_select %p179, %s16, 1
      %p181 = scmp.lt.s32.totalorder %s17, 7
      %s182 = scalar_select %p181, %s17, 7
      %s183 = smul.addr %s182, 4
      %s184 = smul.addr %s180, 32
      %s185 = sadd.s32 %s183, %s184
      %s186 = smul.addr %s185, 8
      %s187 = scalar_lea.vmem %s1, %s186
      %v188 = vld [vmem:[%s171] ss:$2 sm:$0x3]
      %s189 = scalar_lea.vmem %s171, 4
      %v190 = vld [vmem:[%s189] ss:$2 sm:$0x3]
      %s191 = scalar_lea.vmem %s171, 8
      %v192 = vld [vmem:[%s191] ss:$2 sm:$0x3]
      %s193 = scalar_lea.vmem %s171, 12
      %v194 = vld [vmem:[%s193] ss:$2 sm:$0x3]
      %s195 = scalar_lea.vmem %s171, 16
      %v196 = vld [vmem:[%s195] ss:$2 sm:$0x3]
      %s197 = scalar_lea.vmem %s171, 20
      %v198 = vld [vmem:[%s197] ss:$2 sm:$0x3]
      %s199 = scalar_lea.vmem %s171, 24
      %v200 = vld [vmem:[%s199] ss:$2 sm:$0x3]
      %s201 = scalar_lea.vmem %s171, 28
      %v202 = vld [vmem:[%s201] ss:$2 sm:$0x3]
      %s203 = scalar_lea.vmem %s171, 32
      %v204 = vld [vmem:[%s203] ss:$2 sm:$0x3]
      %s205 = scalar_lea.vmem %s171, 36
      %v206 = vld [vmem:[%s205] ss:$2 sm:$0x3]
      %s207 = scalar_lea.vmem %s171, 40
      %v208 = vld [vmem:[%s207] ss:$2 sm:$0x3]
      %s209 = scalar_lea.vmem %s171, 44
      %v210 = vld [vmem:[%s209] ss:$2 sm:$0x3]
      %s211 = scalar_lea.vmem %s171, 48
      %v212 = vld [vmem:[%s211] ss:$2 sm:$0x3]
      %s213 = scalar_lea.vmem %s171, 52
      %v214 = vld [vmem:[%s213] ss:$2 sm:$0x3]
      %s215 = scalar_lea.vmem %s171, 56
      %v216 = vld [vmem:[%s215] ss:$2 sm:$0x3]
      %v217 = vmax.f32 %v188, 0.0
      %v218 = vmax.f32 %v190, 0.0
      %v219 = vmax.f32 %v192, 0.0
      %v220 = vmax.f32 %v194, 0.0
      %v221 = vmax.f32 %v196, 0.0
      %v222 = vmax.f32 %v198, 0.0
      %v223 = vmax.f32 %v200, 0.0
      %v224 = vmax.f32 %v202, 0.0
      %v225 = vmax.f32 %v204, 0.0
      %v226 = vmax.f32 %v206, 0.0
      %v227 = vmax.f32 %v208, 0.0
      %v228 = vmax.f32 %v210, 0.0
      %v229 = vmax.f32 %v212, 0.0
      %v230 = vmax.f32 %v214, 0.0
      %v231 = vmax.f32 %v216, 0.0
      %s232 = scalar_lea.vmem %s171, 1
      %v233 = vld [vmem:[%s232] ss:$2 sm:$0x3]
      %s234 = scalar_lea.vmem %s171, 5
      %v235 = vld [vmem:[%s234] ss:$2 sm:$0x3]
      %s236 = scalar_lea.vmem %s171, 9
      %v237 = vld [vmem:[%s236] ss:$2 sm:$0x3]
      %s238 = scalar_lea.vmem %s171, 13
      %v239 = vld [vmem:[%s238] ss:$2 sm:$0x3]
      %s240 = scalar_lea.vmem %s171, 17
      %v241 = vld [vmem:[%s240] ss:$2 sm:$0x3]
      %s242 = scalar_lea.vmem %s171, 21
      %v243 = vld [vmem:[%s242] ss:$2 sm:$0x3]
      %s244 = scalar_lea.vmem %s171, 25
      %v245 = vld [vmem:[%s244] ss:$2 sm:$0x3]
      %s246 = scalar_lea.vmem %s171, 29
      %v247 = vld [vmem:[%s246] ss:$2 sm:$0x3]
      %s248 = scalar_lea.vmem %s171, 33
      %v249 = vld [vmem:[%s248] ss:$2 sm:$0x3]
      %s250 = scalar_lea.vmem %s171, 37
      %v251 = vld [vmem:[%s250] ss:$2 sm:$0x3]
      %s252 = scalar_lea.vmem %s171, 41
      %v253 = vld [vmem:[%s252] ss:$2 sm:$0x3]
      %s254 = scalar_lea.vmem %s171, 45
      %v255 = vld [vmem:[%s254] ss:$2 sm:$0x3]
      %s256 = scalar_lea.vmem %s171, 49
      %v257 = vld [vmem:[%s256] ss:$2 sm:$0x3]
      %s258 = scalar_lea.vmem %s171, 53
      %v259 = vld [vmem:[%s258] ss:$2 sm:$0x3]
      %s260 = scalar_lea.vmem %s171, 57
      %v261 = vld [vmem:[%s260] ss:$2 sm:$0x3]
      %v262 = vmax.f32 %v233, 0.0
      %v263 = vmax.f32 %v235, 0.0
      %v264 = vmax.f32 %v237, 0.0
      %v265 = vmax.f32 %v239, 0.0
      %v266 = vmax.f32 %v241, 0.0
      %v267 = vmax.f32 %v243, 0.0
      %v268 = vmax.f32 %v245, 0.0
      %v269 = vmax.f32 %v247, 0.0
      %v270 = vmax.f32 %v249, 0.0
      %v271 = vmax.f32 %v251, 0.0
      %v272 = vmax.f32 %v253, 0.0
      %v273 = vmax.f32 %v255, 0.0
      %v274 = vmax.f32 %v257, 0.0
      %v275 = vmax.f32 %v259, 0.0
      %v276 = vmax.f32 %v261, 0.0
      %v277 = vadd.f32 %v217, %v262
      %v278 = vadd.f32 %v218, %v263
      %v279 = vadd.f32 %v219, %v264
      %v280 = vadd.f32 %v220, %v265
      %v281 = vadd.f32 %v221, %v266
      %v282 = vadd.f32 %v222, %v267
      %v283 = vadd.f32 %v223, %v268
      %v284 = vadd.f32 %v224, %v269
      %v285 = vadd.f32 %v225, %v270
      %v286 = vadd.f32 %v226, %v271
      %v287 = vadd.f32 %v227, %v272
      %v288 = vadd.f32 %v228, %v273
      %v289 = vadd.f32 %v229, %v274
      %v290 = vadd.f32 %v230, %v275
      %v291 = vadd.f32 %v231, %v276
      %s292 = scalar_lea.vmem %s171, 60
      %v293 = vld [vmem:[%s292] ss:$2 sm:$0x3]
      %s294 = scalar_lea.vmem %s292, 4
      %v295 = vld [vmem:[%s294] ss:$2 sm:$0x3]
      %s296 = scalar_lea.vmem %s292, 8
      %v297 = vld [vmem:[%s296] ss:$2 sm:$0x3]
      %s298 = scalar_lea.vmem %s292, 12
      %v299 = vld [vmem:[%s298] ss:$2 sm:$0x3]
      %s300 = scalar_lea.vmem %s292, 16
      %v301 = vld [vmem:[%s300] ss:$2 sm:$0x3]
      %s302 = scalar_lea.vmem %s292, 20
      %v303 = vld [vmem:[%s302] ss:$2 sm:$0x3]
      %s304 = scalar_lea.vmem %s292, 24
      %v305 = vld [vmem:[%s304] ss:$2 sm:$0x3]
      %s306 = scalar_lea.vmem %s292, 28
      %v307 = vld [vmem:[%s306] ss:$2 sm:$0x3]
      %s308 = scalar_lea.vmem %s292, 32
      %v309 = vld [vmem:[%s308] ss:$2 sm:$0x3]
      %s310 = scalar_lea.vmem %s292, 36
      %v311 = vld [vmem:[%s310] ss:$2 sm:$0x3]
      %s312 = scalar_lea.vmem %s292, 40
      %v313 = vld [vmem:[%s312] ss:$2 sm:$0x3]
      %s314 = scalar_lea.vmem %s292, 44
      %v315 = vld [vmem:[%s314] ss:$2 sm:$0x3]
      %s316 = scalar_lea.vmem %s292, 48
      %v317 = vld [vmem:[%s316] ss:$2 sm:$0x3]
      %s318 = scalar_lea.vmem %s292, 52
      %v319 = vld [vmem:[%s318] ss:$2 sm:$0x3]
      %s320 = scalar_lea.vmem %s292, 56
      %v321 = vld [vmem:[%s320] ss:$2 sm:$0x3]
      %v322 = vmax.f32 %v293, 0.0
      %v323 = vmax.f32 %v295, 0.0
      %v324 = vmax.f32 %v297, 0.0
      %v325 = vmax.f32 %v299, 0.0
      %v326 = vmax.f32 %v301, 0.0
      %v327 = vmax.f32 %v303, 0.0
      %v328 = vmax.f32 %v305, 0.0
      %v329 = vmax.f32 %v307, 0.0
      %v330 = vmax.f32 %v309, 0.0
      %v331 = vmax.f32 %v311, 0.0
      %v332 = vmax.f32 %v313, 0.0
      %v333 = vmax.f32 %v315, 0.0
      %v334 = vmax.f32 %v317, 0.0
      %v335 = vmax.f32 %v319, 0.0
      %v336 = vmax.f32 %v321, 0.0
      %v337 = vadd.f32 %v277, %v322
      %v338 = vadd.f32 %v278, %v323
      %v339 = vadd.f32 %v279, %v324
      %v340 = vadd.f32 %v280, %v325
      %v341 = vadd.f32 %v281, %v326
      %v342 = vadd.f32 %v282, %v327
      %v343 = vadd.f32 %v283, %v328
      %v344 = vadd.f32 %v284, %v329
      %v345 = vadd.f32 %v285, %v330
      %v346 = vadd.f32 %v286, %v331
      %v347 = vadd.f32 %v287, %v332
      %v348 = vadd.f32 %v288, %v333
      %v349 = vadd.f32 %v289, %v334
      %v350 = vadd.f32 %v290, %v335
      %v351 = vadd.f32 %v291, %v336
      %s352 = scalar_lea.vmem %s292, 1
      %v353 = vld [vmem:[%s352] ss:$2 sm:$0x3]
      %s354 = scalar_lea.vmem %s292, 5
      %v355 = vld [vmem:[%s354] ss:$2 sm:$0x3]
      %s356 = scalar_lea.vmem %s292, 9
      %v357 = vld [vmem:[%s356] ss:$2 sm:$0x3]
      %s358 = scalar_lea.vmem %s292, 13
      %v359 = vld [vmem:[%s358] ss:$2 sm:$0x3]
      %s360 = scalar_lea.vmem %s292, 17
      %v361 = vld [vmem:[%s360] ss:$2 sm:$0x3]
      %s362 = scalar_lea.vmem %s292, 21
      %v363 = vld [vmem:[%s362] ss:$2 sm:$0x3]
      %s364 = scalar_lea.vmem %s292, 25
      %v365 = vld [vmem:[%s364] ss:$2 sm:$0x3]
      %s366 = scalar_lea.vmem %s292, 29
      %v367 = vld [vmem:[%s366] ss:$2 sm:$0x3]
      %s368 = scalar_lea.vmem %s292, 33
      %v369 = vld [vmem:[%s368] ss:$2 sm:$0x3]
      %s370 = scalar_lea.vmem %s292, 37
      %v371 = vld [vmem:[%s370] ss:$2 sm:$0x3]
      %s372 = scalar_lea.vmem %s292, 41
      %v373 = vld [vmem:[%s372] ss:$2 sm:$0x3]
      %s374 = scalar_lea.vmem %s292, 45
      %v375 = vld [vmem:[%s374] ss:$2 sm:$0x3]
      %s376 = scalar_lea.vmem %s292, 49
      %v377 = vld [vmem:[%s376] ss:$2 sm:$0x3]
      %s378 = scalar_lea.vmem %s292, 53
      %v379 = vld [vmem:[%s378] ss:$2 sm:$0x3]
      %s380 = scalar_lea.vmem %s292, 57
      %v381 = vld [vmem:[%s380] ss:$2 sm:$0x3]
      %v382 = vmax.f32 %v353, 0.0
      %v383 = vmax.f32 %v355, 0.0
      %v384 = vmax.f32 %v357, 0.0
      %v385 = vmax.f32 %v359, 0.0
      %v386 = vmax.f32 %v361, 0.0
      %v387 = vmax.f32 %v363, 0.0
      %v388 = vmax.f32 %v365, 0.0
      %v389 = vmax.f32 %v367, 0.0
      %v390 = vmax.f32 %v369, 0.0
      %v391 = vmax.f32 %v371, 0.0
      %v392 = vmax.f32 %v373, 0.0
      %v393 = vmax.f32 %v375, 0.0
      %v394 = vmax.f32 %v377, 0.0
      %v395 = vmax.f32 %v379, 0.0
      %v396 = vmax.f32 %v381, 0.0
      %v397 = vadd.f32 %v337, %v382
      %v398 = vadd.f32 %v338, %v383
      %v399 = vadd.f32 %v339, %v384
      %v400 = vadd.f32 %v340, %v385
      %v401 = vadd.f32 %v341, %v386
      %v402 = vadd.f32 %v342, %v387
      %v403 = vadd.f32 %v343, %v388
      %v404 = vadd.f32 %v344, %v389
      %v405 = vadd.f32 %v345, %v390
      %v406 = vadd.f32 %v346, %v391
      %v407 = vadd.f32 %v347, %v392
      %v408 = vadd.f32 %v348, %v393
      %v409 = vadd.f32 %v349, %v394
      %v410 = vadd.f32 %v350, %v395
      %v411 = vadd.f32 %v351, %v396
      %v412 = vmul.f32 %v397, 0.125
      %v413 = vmul.f32 %v398, 0.125
      %v414 = vmul.f32 %v399, 0.125
      %v415 = vmul.f32 %v400, 0.125
      %v416 = vmul.f32 %v401, 0.125
      %v417 = vmul.f32 %v402, 0.125
      %v418 = vmul.f32 %v403, 0.125
      %v419 = vmul.f32 %v404, 0.125
      %v420 = vmul.f32 %v405, 0.125
      %v421 = vmul.f32 %v406, 0.125
      %v422 = vmul.f32 %v407, 0.125
      %v423 = vmul.f32 %v408, 0.125
      %v424 = vmul.f32 %v409, 0.125
      %v425 = vmul.f32 %v410, 0.125
      %v426 = vmul.f32 %v411, 0.125
      %v442 = vcombine.low %v412, %v413
      %v443 = vcombine.low %v414, %v415
      %v444 = vcombine.low %v416, %v417
      %v445 = vcombine.low %v418, %v419
      %v447 = vunpack.c.l.s4 1966171168
      %v448 = vunpack.c.0.s8 %v447
      %v449 = vlaneseq
      %v450 = vshrl.u32 %v449, 7
      %v451 = vsub.s32 %v448, %v450
      %v452 = vrot.slane %v442, %v451
      %v454 = vunpack.c.l.s4 1966171168
      %v455 = vunpack.c.0.s8 %v454
      %v456 = vlaneseq
      %v457 = vshrl.u32 %v456, 7
      %v458 = vsub.s32 %v455, %v457
      %v459 = vrot.slane %v443, %v458
      %v461 = vunpack.c.l.s4 1966171168
      %v462 = vunpack.c.0.s8 %v461
      %v463 = vlaneseq
      %v464 = vshrl.u32 %v463, 7
      %v465 = vsub.s32 %v462, %v464
      %v466 = vrot.slane %v444, %v465
      %v468 = vunpack.c.l.s4 1966171168
      %v469 = vunpack.c.0.s8 %v468
      %v470 = vlaneseq
      %v471 = vshrl.u32 %v470, 7
      %v472 = vsub.s32 %v469, %v471
      %v473 = vrot.slane %v445, %v472
      %v474 = vcombine.low %v452, %v459
      %v475 = vcombine.high %v452, %v459
      %v476 = vcombine.low %v466, %v473
      %v477 = vcombine.high %v466, %v473
      %v479 = vunpack.c.l.s4 1966171168
      %v480 = vunpack.c.0.s8 %v479
      %v481 = vlaneseq
      %v482 = vshrl.u32 %v481, 7
      %v483 = vsub.s32 %v480, %v482
      %v484 = vrot.slane %v474, %v483
      %v486 = vunpack.c.l.s4 1966171168
      %v487 = vunpack.c.0.s8 %v486
      %v488 = vlaneseq
      %v489 = vshrl.u32 %v488, 7
      %v490 = vsub.s32 %v487, %v489
      %v491 = vrot.slane %v475, %v490
      %v493 = vunpack.c.l.s4 1966171168
      %v494 = vunpack.c.0.s8 %v493
      %v495 = vlaneseq
      %v496 = vshrl.u32 %v495, 7
      %v497 = vsub.s32 %v494, %v496
      %v498 = vrot.slane %v476, %v497
      %v500 = vunpack.c.l.s4 1966171168
      %v501 = vunpack.c.0.s8 %v500
      %v502 = vlaneseq
      %v503 = vshrl.u32 %v502, 7
      %v504 = vsub.s32 %v501, %v503
      %v505 = vrot.slane %v477, %v504
      %v506 = vcombine.low %v484, %v498
      %v507 = vcombine.low %v491, %v505
      %v508 = vcombine.low %v420, %v421
      %v509 = vcombine.low %v422, %v423
      %v510 = vcombine.low %v424, %v425
      %v512 = vunpack.c.l.s4 1966171168
      %v513 = vunpack.c.0.s8 %v512
      %v514 = vlaneseq
      %v515 = vshrl.u32 %v514, 7
      %v516 = vsub.s32 %v513, %v515
      %v517 = vrot.slane %v508, %v516
      %v519 = vunpack.c.l.s4 1966171168
      %v520 = vunpack.c.0.s8 %v519
      %v521 = vlaneseq
      %v522 = vshrl.u32 %v521, 7
      %v523 = vsub.s32 %v520, %v522
      %v524 = vrot.slane %v509, %v523
      %v526 = vunpack.c.l.s4 1966171168
      %v527 = vunpack.c.0.s8 %v526
      %v528 = vlaneseq
      %v529 = vshrl.u32 %v528, 7
      %v530 = vsub.s32 %v527, %v529
      %v531 = vrot.slane %v510, %v530
      %v533 = vunpack.c.l.s4 1966171168
      %v534 = vunpack.c.0.s8 %v533
      %v535 = vlaneseq
      %v536 = vshrl.u32 %v535, 7
      %v537 = vsub.s32 %v534, %v536
      %v538 = vrot.slane %v426, %v537
      %v539 = vcombine.low %v517, %v524
      %v540 = vcombine.high %v517, %v524
      %v541 = vcombine.low %v531, %v538
      %v542 = vcombine.high %v531, %v538
      %v544 = vunpack.c.l.s4 1966171168
      %v545 = vunpack.c.0.s8 %v544
      %v546 = vlaneseq
      %v547 = vshrl.u32 %v546, 7
      %v548 = vsub.s32 %v545, %v547
      %v549 = vrot.slane %v539, %v548
      %v551 = vunpack.c.l.s4 1966171168
      %v552 = vunpack.c.0.s8 %v551
      %v553 = vlaneseq
      %v554 = vshrl.u32 %v553, 7
      %v555 = vsub.s32 %v552, %v554
      %v556 = vrot.slane %v540, %v555
      %v558 = vunpack.c.l.s4 1966171168
      %v559 = vunpack.c.0.s8 %v558
      %v560 = vlaneseq
      %v561 = vshrl.u32 %v560, 7
      %v562 = vsub.s32 %v559, %v561
      %v563 = vrot.slane %v541, %v562
      %v565 = vunpack.c.l.s4 1966171168
      %v566 = vunpack.c.0.s8 %v565
      %v567 = vlaneseq
      %v568 = vshrl.u32 %v567, 7
      %v569 = vsub.s32 %v566, %v568
      %v570 = vrot.slane %v542, %v569
      %v571 = vcombine.low %v549, %v563
      %v572 = vcombine.low %v556, %v570
      %577 = vst [vmem:[%s187] sm:$0xff] %v506
      %578 = vst [vmem:[%s187 + $0x8] sm:$0xff] %v507
      %579 = vst [vmem:[%s187 + $0x10] sm:$0x7f] %v571
      %580 = vst [vmem:[%s187 + $0x18] sm:$0x7f] %v572
      %p581 = scmp.lt.s32.totalorder %s16, 1
      %s582 = scalar_select %p581, %s16, 1
      %p583 = scmp.lt.s32.totalorder %s17, 7
      %s584 = scalar_select %p583, %s17, 7
      %s585 = smul.addr %s584, 4
      %s586 = smul.addr %s582, 32
      %s587 = sadd.s32 %s585, %s586
      %s588 = smul.addr %s587, 8
      %s589 = scalar_lea.vmem %s1, %s588
      // Predicated region
      $region25: #{model_forward.6} parent=23 // pred_check
        %p590 = pneg %p72
      $region26: #{model_forward.6} parent=23 // pred_check_branch
        %592 = sbr.rel (%p590) target = $region28
      $region27: #{model_forward.6} parent=23 // pred_region
        _
      $region28: #{model_forward.6} parent=23 // pred_fallthru
        _
    $region24: #{model_forward.6} parent=5 // pred_fallthru
      _
    %p593 = scmp.le.s32.totalorder 2, %s7
    // Predicated region
    $region29: #{model_forward.6} parent=5 // pred_check
      %p594 = pneg %p593
    $region30: #{model_forward.6} parent=5 // pred_check_branch
      %596 = sbr.rel (%p594) target = $region32
    $region31: #{model_forward.6} parent=5 // pred_region
      %s597 = ssub.s32 %s7, 2
      // Predicated region
      $region33: #{model_forward.6} parent=31 // pred_check
        %p598 = pneg %p78
      $region34: #{model_forward.6} parent=31 // pred_check_branch
        %600 = sbr.rel (%p598) target = $region36
      $region35: #{model_forward.6} parent=31 // pred_region
        %p601 = scmp.lt.s32.totalorder %s18, 1
        %s602 = scalar_select %p601, %s18, 1
        %p603 = scmp.lt.s32.totalorder %s19, 7
        %s604 = scalar_select %p603, %s19, 7
        %s605 = smul.addr %s604, 4
        %s606 = smul.addr %s602, 32
        %s607 = sadd.s32 %s605, %s606
        %s608 = smul.addr %s607, 8
        %s609 = scalar_lea.vmem %s1, %s608
      $region36: #{model_forward.6} parent=31 // pred_fallthru
        _
    $region32: #{model_forward.6} parent=5 // pred_fallthru
      _
  $region6: #{model_forward.6} parent=0 // loop_footer
    %s11 = sadd.s32 1, %s7
  $region7: #{model_forward.6} parent=0 // loop_footer_branch
    %6 = sbr.rel target = $region3
  $region8: #{model_forward.6} parent=0 // loop_exit
    _

// kernel: model_forward.7
$region0: #{model_forward.7}
  #allocation0 [shape = 'u32[]', space=smem, size = 0x4, offset = 0x4, fixed_abs, tag = 'smem constant byte address 0x4 - core index']
  #allocation1 [shape = 'u32[144,128]{1,0:T(1,128)}', space=vmem, size = 0x12000, scoped, tag = 'internal scratch']
  #allocation2 [shape = 'f32[8,128]{1,0:T(8,128)}', space=vmem, size = 0x1000, scoped, tag = 'scratch operand']
  %s0 = inlined_call_operand.vmem [shape: bf16[8,15360], index: 0, kind: input, shape index: {}]
  %s1 = inlined_call_operand.vmem [shape: bf16[15360,128], index: 1, kind: input, shape index: {}]
  %s2 = inlined_call_operand.vmem [shape: f32[8,128], index: 2, kind: output, shape index: {}]
  %s3 = sld [smem:[#allocation0]]
  $region49: #{model_forward.7} parent=0
    _
  %s5 = ssub.s32 1, %s3
  %s6 = scalar_select 0, %s5, %s3
  loop: start=0, step=1, limit=32
  $region2: #{model_forward.7} parent=0 // loop_pre_header
    _
  $region3: #{model_forward.7} parent=0 // loop_header
    %s8 = sphi 0, %s12
    %p9 = scmp.ge.s32.totalorder %s8, 32
    %s15 = sphi 0, %s34
    %s16 = sphi 0, %s30
    %s17 = sphi 0, %s26
    %s18 = sphi 0, %s15
    %s19 = sphi 0, %s16
    %s20 = sphi 0, %s17
    %s21 = sphi 0, %s18
    %s22 = sphi 0, %s19
    %s23 = sphi 0, %s20
    %s39 = sphi 0, %s41
    %s42 = sphi 0, %s39
    %s43 = sphi 0, %s42
    %s59 = sphi 0, %s43
    %s67 = sphi 0, %s69
    %s70 = sphi 0, %s67
    %s71 = sphi 0, %s70
    %s87 = sphi 0, %s71
    %s95 = sphi 0, %s97
    %s98 = sphi 0, %s95
    %s99 = sphi 0, %s98
    %s115 = sphi 0, %s99
  $region4: #{model_forward.7} parent=0 // loop_header_branch
    %11 = sbr.rel (%p9) target = $region8
  $region5: #{model_forward.7} parent=0 // loop_body
    %s13 = ssub.s32 %s8, 1
    %s14 = ssub.s32 %s8, 2
    %s24 = sadd.s32 1, %s17
    %p25 = scmp.ge.s32.totalorder %s24, 30
    %s26 = scalar_select %p25, 0, %s24
    %s27 = sadd.s32 1, %s16
    %s28 = scalar_select %p25, %s27, %s16
    %p29 = scmp.ge.s32.totalorder %s28, 1
    %s30 = scalar_select %p29, 0, %s28
    %s31 = sadd.s32 1, %s15
    %s32 = scalar_select %p29, %s31, %s15
    %p33 = scmp.ge.s32.totalorder %s32, 1
    %s34 = scalar_select %p33, 0, %s32
    %s35 = ssub.s32 %s15, %s34
    %s36 = ssub.s32 %s17, %s26
    %s37 = sor.u32 %s35, %s36
    %p38 = scmp.eq.s32.totalorder %s37, 0
    %s40 = sadd.s32 %s39, 1
    %s41 = scalar_select %p38, %s39, %s40
    %p44 = pneg %p38
    %p45 = scmp.eq.s32.totalorder %s8, 29
    %p46 = por %p44, %p45
    %p47 = scmp.ne.s32.totalorder %s39, %s42
    %p48 = scmp.eq.s32.totalorder %s8, 0
    %p49 = por %p47, %p48
    %p50 = scmp.ne.s32.totalorder %s39, %s42
    %p51 = scmp.eq.s32.totalorder %s13, 29
    %p52 = por %p50, %p51
    %p53 = scmp.ne.s32.totalorder %s42, %s43
    %p54 = scmp.eq.s32.totalorder %s13, 0
    %p55 = por %p53, %p54
    %p56 = scmp.ne.s32.totalorder %s42, %s43
    %p57 = scmp.eq.s32.totalorder %s14, 29
    %p58 = por %p56, %p57
    %p60 = scmp.ne.s32.totalorder %s43, %s59
    %p61 = scmp.eq.s32.totalorder %s14, 0
    %p62 = por %p60, %p61
    %s63 = ssub.s32 %s17, %s26
    %s64 = ssub.s32 %s16, %s30
    %s65 = sor.u32 %s63, %s64
    %p66 = scmp.eq.s32.totalorder %s65, 0
    %s68 = sadd.s32 %s67, 1
    %s69 = scalar_select %p66, %s67, %s68
    %p72 = pneg %p66
    %p73 = scmp.eq.s32.totalorder %s8, 29
    %p74 = por %p72, %p73
    %p75 = scmp.ne.s32.totalorder %s67, %s70
    %p76 = scmp.eq.s32.totalorder %s8, 0
    %p77 = por %p75, %p76
    %p78 = scmp.ne.s32.totalorder %s67, %s70
    %p79 = scmp.eq.s32.totalorder %s13, 29
    %p80 = por %p78, %p79
    %p81 = scmp.ne.s32.totalorder %s70, %s71
    %p82 = scmp.eq.s32.totalorder %s13, 0
    %p83 = por %p81, %p82
    %p84 = scmp.ne.s32.totalorder %s70, %s71
    %p85 = scmp.eq.s32.totalorder %s14, 29
    %p86 = por %p84, %p85
    %p88 = scmp.ne.s32.totalorder %s71, %s87
    %p89 = scmp.eq.s32.totalorder %s14, 0
    %p90 = por %p88, %p89
    %s91 = ssub.s32 %s15, %s34
    %s92 = ssub.s32 %s16, %s30
    %s93 = sor.u32 %s91, %s92
    %p94 = scmp.eq.s32.totalorder %s93, 0
    %s96 = sadd.s32 %s95, 1
    %s97 = scalar_select %p94, %s95, %s96
    %p100 = pneg %p94
    %p101 = scmp.eq.s32.totalorder %s8, 29
    %p102 = por %p100, %p101
    %p103 = scmp.ne.s32.totalorder %s95, %s98
    %p104 = scmp.eq.s32.totalorder %s8, 0
    %p105 = por %p103, %p104
    %p106 = scmp.ne.s32.totalorder %s95, %s98
    %p107 = scmp.eq.s32.totalorder %s13, 29
    %p108 = por %p106, %p107
    %p109 = scmp.ne.s32.totalorder %s98, %s99
    %p110 = scmp.eq.s32.totalorder %s13, 0
    %p111 = por %p109, %p110
    %p112 = scmp.ne.s32.totalorder %s98, %s99
    %p113 = scmp.eq.s32.totalorder %s14, 29
    %p114 = por %p112, %p113
    %p116 = scmp.ne.s32.totalorder %s99, %s115
    %p117 = scmp.eq.s32.totalorder %s14, 0
    %p118 = por %p116, %p117
    %p119 = scmp.le.s32.totalorder 1, %s8
    %p120 = scmp.lt.s32.totalorder %s8, 31
    %p121 = pnand %p119, %p120
    %p122 = pneg %p121
    // Predicated region
    $region9: #{model_forward.7} parent=5 // pred_check
      _
    $region10: #{model_forward.7} parent=5 // pred_check_branch
      %124 = sbr.rel (%p121) target = $region12
    $region11: #{model_forward.7} parent=5 // pred_region
      %s125 = ssub.s32 %s8, 1
    $region12: #{model_forward.7} parent=5 // pred_fallthru
      _
    %p126 = scmp.lt.s32.totalorder %s8, 30
    // Predicated region
    $region13: #{model_forward.7} parent=5 // pred_check
      %p127 = pneg %p126
    $region14: #{model_forward.7} parent=5 // pred_check_branch
      %129 = sbr.rel (%p127) target = $region16
    $region15: #{model_forward.7} parent=5 // pred_region
      // Predicated region
      $region17: #{model_forward.7} parent=15 // pred_check
        %p130 = pneg %p49
      $region18: #{model_forward.7} parent=15 // pred_check_branch
        %132 = sbr.rel (%p130) target = $region20
      $region19: #{model_forward.7} parent=15 // pred_region
        %s133 = smul.u32 4, %s17
        %p134 = scmp.lt.s32.totalorder %s15, 0
        %s135 = scalar_select %p134, %s15, 0
        %p136 = scmp.lt.s32.totalorder %s133, 119
        %s137 = scalar_select %p136, %s133, 119
        %s138 = smul.addr %s135, 120
        %s139 = sadd.s32 %s137, %s138
        %s140 = smul.addr %s139, 4
        %s141 = scalar_lea.vmem %s0, %s140
        %s142 = smul.u32 4, %s17
      $region20: #{model_forward.7} parent=15 // pred_fallthru
        _
      // Predicated region
      $region21: #{model_forward.7} parent=15 // pred_check
        %p143 = pneg %p77
      $region22: #{model_forward.7} parent=15 // pred_check_branch
        %145 = sbr.rel (%p143) target = $region24
      $region23: #{model_forward.7} parent=15 // pred_region
        %s146 = smul.u32 64, %s17
        %p147 = scmp.lt.s32.totalorder %s146, 1919
        %s148 = scalar_select %p147, %s146, 1919
        %p149 = scmp.lt.s32.totalorder %s16, 0
        %s150 = scalar_select %p149, %s16, 0
        %s151 = sadd.s32 %s150, %s148
        %s152 = smul.addr %s151, 4
        %s153 = scalar_lea.vmem %s1, %s152
        %s154 = smul.u32 64, %s17
      $region24: #{model_forward.7} parent=15 // pred_fallthru
        _
    $region16: #{model_forward.7} parent=5 // pred_fallthru
      _
    %p155 = scmp.le.s32.totalorder 1, %s8
    %p156 = scmp.lt.s32.totalorder %s8, 31
    %p157 = pnand %p155, %p156
    %p158 = pneg %p157
    // Predicated region
    $region25: #{model_forward.7} parent=5 // pred_check
      _
    $region26: #{model_forward.7} parent=5 // pred_check_branch
      %160 = sbr.rel (%p157) target = $region28
    $region27: #{model_forward.7} parent=5 // pred_region
      %s161 = ssub.s32 %s8, 1
      %s162 = smul.u32 4, %s20
      %p163 = scmp.lt.s32.totalorder %s18, 0
      %s164 = scalar_select %p163, %s18, 0
      %p165 = scmp.lt.s32.totalorder %s162, 119
      %s166 = scalar_select %p165, %s162, 119
      %s167 = smul.addr %s164, 120
      %s168 = sadd.s32 %s166, %s167
      %s169 = smul.addr %s168, 4
      %s170 = scalar_lea.vmem %s0, %s169
      %p171 = pneg %p55
      %p172 = pneg %p52
      %s173 = smul.u32 64, %s20
      %p174 = scmp.lt.s32.totalorder %s173, 1919
      %s175 = scalar_select %p174, %s173, 1919
      %p176 = scmp.lt.s32.totalorder %s19, 0
      %s177 = scalar_select %p176, %s19, 0
      %s178 = sadd.s32 %s177, %s175
      %s179 = smul.addr %s178, 4
      %s180 = scalar_lea.vmem %s1, %s179
      %p181 = pneg %p83
      %p182 = pneg %p80
      %p183 = pneg %p111
      %p184 = pneg %p108
      %p185 = scmp.lt.s32.totalorder %s18, 0
      %s186 = scalar_select %p185, %s18, 0
      %p187 = scmp.lt.s32.totalorder %s19, 0
      %s188 = scalar_select %p187, %s19, 0
      %s189 = sadd.s32 %s188, %s186
      %s190 = smul.addr %s189, 8
      %s191 = scalar_lea.vmem %s2, %s190
      %s192 = smul.u32 4, %s20
      %p193 = scmp.lt.s32.totalorder %s18, 0
      %s194 = scalar_select %p193, %s18, 0
      %p195 = scmp.lt.s32.totalorder %s192, 119
      %s196 = scalar_select %p195, %s192, 119
      %s197 = smul.addr %s194, 120
      %s198 = sadd.s32 %s196, %s197
      %s199 = smul.addr %s198, 4
      %s200 = scalar_lea.vmem %s0, %s199
      %s201 = smul.u32 4, %s20
      %s202 = smul.u32 64, %s20
      %p203 = scmp.lt.s32.totalorder %s202, 1919
      %s204 = scalar_select %p203, %s202, 1919
      %p205 = scmp.lt.s32.totalorder %s19, 0
      %s206 = scalar_select %p205, %s19, 0
      %s207 = sadd.s32 %s206, %s204
      %s208 = smul.addr %s207, 4
      %s209 = scalar_lea.vmem %s1, %s208
      %s210 = smul.u32 64, %s20
      %p211 = scmp.lt.s32.totalorder %s18, 0
      %s212 = scalar_select %p211, %s18, 0
      %p213 = scmp.lt.s32.totalorder %s19, 0
      %s214 = scalar_select %p213, %s19, 0
      %s215 = sadd.s32 %s214, %s212
      %s216 = smul.addr %s215, 8
      %s217 = scalar_lea.vmem %s2, %s216
      %p219 = scmp.eq.s32.totalorder %s20, 0
      // Predicated region
      $region29: #{model_forward.7} parent=27 // pred_check
        %p220 = pneg %p219
      $region30: #{model_forward.7} parent=27 // pred_check_branch
        %222 = sbr.rel (%p220) target = $region32
      $region31: #{model_forward.7} parent=27 // pred_region
        %223 = vst [vmem:[#allocation2] sm:$0xff] 0.0
      $region32: #{model_forward.7} parent=27 // pred_fallthru
        _
      %v224 = vld [vmem:[#allocation2] sm:$0xff]
      %v225 = vld [vmem:[%s200] sm:$0xff]
      %v226 = vld [vmem:[%s200 + $0x8] sm:$0xff]
      %v227 = vld [vmem:[%s209] sm:$0xf]
      %v228 = vld [vmem:[%s209 + $0x4] sm:$0xf]
      %v229 = vld [vmem:[%s209 + $0x8] sm:$0xf]
      %v230 = vld [vmem:[%s209 + $0xc] sm:$0xf]
      %v231 = vld [vmem:[%s209 + $0x10] sm:$0xf]
      %v232 = vld [vmem:[%s209 + $0x14] sm:$0xf]
      %v233 = vld [vmem:[%s209 + $0x18] sm:$0xf]
      %v234 = vld [vmem:[%s209 + $0x1c] sm:$0xf]
      %v235 = vld [vmem:[%s209 + $0x20] sm:$0xf]
      %v236 = vld [vmem:[%s209 + $0x24] sm:$0xf]
      %v237 = vld [vmem:[%s209 + $0x28] sm:$0xf]
      %v238 = vld [vmem:[%s209 + $0x2c] sm:$0xf]
      %v239 = vld [vmem:[%s209 + $0x30] sm:$0xf]
      %v240 = vld [vmem:[%s209 + $0x34] sm:$0xf]
      %v241 = vld [vmem:[%s209 + $0x38] sm:$0xf]
      %v242 = vld [vmem:[%s209 + $0x3c] sm:$0xf]
      %v243 = vld [vmem:[%s209 + $0x40] sm:$0xf]
      %v244 = vld [vmem:[%s209 + $0x44] sm:$0xf]
      %v245 = vld [vmem:[%s209 + $0x48] sm:$0xf]
      %v246 = vld [vmem:[%s209 + $0x4c] sm:$0xf]
      %v247 = vld [vmem:[%s209 + $0x50] sm:$0xf]
      %v248 = vld [vmem:[%s209 + $0x54] sm:$0xf]
      %v249 = vld [vmem:[%s209 + $0x58] sm:$0xf]
      %v250 = vld [vmem:[%s209 + $0x5c] sm:$0xf]
      %v251 = vld [vmem:[%s209 + $0x60] sm:$0xf]
      %v252 = vld [vmem:[%s209 + $0x64] sm:$0xf]
      %v253 = vld [vmem:[%s209 + $0x68] sm:$0xf]
      %v254 = vld [vmem:[%s209 + $0x6c] sm:$0xf]
      %v255 = vld [vmem:[%s209 + $0x70] sm:$0xf]
      %v256 = vld [vmem:[%s209 + $0x74] sm:$0xf]
      %v257 = vld [vmem:[%s209 + $0x78] sm:$0xf]
      %v258 = vld [vmem:[%s209 + $0x7c] sm:$0xf]
      %v259 = vld [vmem:[%s209 + $0x80] sm:$0xf]
      %v260 = vld [vmem:[%s209 + $0x84] sm:$0xf]
      %v261 = vld [vmem:[%s209 + $0x88] sm:$0xf]
      %v262 = vld [vmem:[%s209 + $0x8c] sm:$0xf]
      %v263 = vld [vmem:[%s209 + $0x90] sm:$0xf]
      %v264 = vld [vmem:[%s209 + $0x94] sm:$0xf]
      %v265 = vld [vmem:[%s209 + $0x98] sm:$0xf]
      %v266 = vld [vmem:[%s209 + $0x9c] sm:$0xf]
      %v267 = vld [vmem:[%s209 + $0xa0] sm:$0xf]
      %v268 = vld [vmem:[%s209 + $0xa4] sm:$0xf]
      %v269 = vld [vmem:[%s209 + $0xa8] sm:$0xf]
      %v270 = vld [vmem:[%s209 + $0xac] sm:$0xf]
      %v271 = vld [vmem:[%s209 + $0xb0] sm:$0xf]
      %v272 = vld [vmem:[%s209 + $0xb4] sm:$0xf]
      %v273 = vld [vmem:[%s209 + $0xb8] sm:$0xf]
      %v274 = vld [vmem:[%s209 + $0xbc] sm:$0xf]
      %v275 = vld [vmem:[%s209 + $0xc0] sm:$0xf]
      %v276 = vld [vmem:[%s209 + $0xc4] sm:$0xf]
      %v277 = vld [vmem:[%s209 + $0xc8] sm:$0xf]
      %v278 = vld [vmem:[%s209 + $0xcc] sm:$0xf]
      %v279 = vld [vmem:[%s209 + $0xd0] sm:$0xf]
      %v280 = vld [vmem:[%s209 + $0xd4] sm:$0xf]
      %v281 = vld [vmem:[%s209 + $0xd8] sm:$0xf]
      %v282 = vld [vmem:[%s209 + $0xdc] sm:$0xf]
      %v283 = vld [vmem:[%s209 + $0xe0] sm:$0xf]
      %v284 = vld [vmem:[%s209 + $0xe4] sm:$0xf]
      %v285 = vld [vmem:[%s209 + $0xe8] sm:$0xf]
      %v286 = vld [vmem:[%s209 + $0xec] sm:$0xf]
      %v287 = vld [vmem:[%s209 + $0xf0] sm:$0xf]
      %v288 = vld [vmem:[%s209 + $0xf4] sm:$0xf]
      %v289 = vld [vmem:[%s209 + $0xf8] sm:$0xf]
      %v290 = vld [vmem:[%s209 + $0xfc] sm:$0xf]
      %v293 = vunpack.c.l.b16 %v225
      %v294 = vunpack.c.h.b16 %v225
      %v295 = vunpack.c.l.b16 %v226
      %v296 = vunpack.c.h.b16 %v226
      %v297 = vpack.c.b16 %v293, %v293
      %v298 = vpack.c.b16 %v294, %v294
      %v299 = vpack.c.b16 %v295, %v295
      %v300 = vpack.c.b16 %v296, %v296
      %v369 = vunpack.c.l.b16 %v227
      %v370 = vunpack.c.l.b16 %v228
      %v371 = vunpack.c.l.b16 %v229
      %v372 = vunpack.c.l.b16 %v230
      %v373 = vunpack.c.l.b16 %v231
      %v374 = vunpack.c.l.b16 %v232
      %v375 = vunpack.c.l.b16 %v233
      %v376 = vunpack.c.l.b16 %v234
      %v377 = vunpack.c.l.b16 %v235
      %v378 = vunpack.c.l.b16 %v236
      %v379 = vunpack.c.l.b16 %v237
      %v380 = vunpack.c.l.b16 %v238
      %v381 = vunpack.c.l.b16 %v239
      %v382 = vunpack.c.l.b16 %v240
      %v383 = vunpack.c.l.b16 %v241
      %v384 = vunpack.c.l.b16 %v242
      %v385 = vunpack.c.l.b16 %v243
      %v386 = vunpack.c.l.b16 %v244
      %v387 = vunpack.c.l.b16 %v245
      %v388 = vunpack.c.l.b16 %v246
      %v389 = vunpack.c.l.b16 %v247
      %v390 = vunpack.c.l.b16 %v248
      %v391 = vunpack.c.l.b16 %v249
      %v392 = vunpack.c.l.b16 %v250
      %v393 = vunpack.c.l.b16 %v251
      %v394 = vunpack.c.l.b16 %v252
      %v395 = vunpack.c.l.b16 %v253
      %v396 = vunpack.c.l.b16 %v254
      %v397 = vunpack.c.l.b16 %v255
      %v398 = vunpack.c.l.b16 %v256
      %v399 = vunpack.c.l.b16 %v257
      %v400 = vunpack.c.l.b16 %v258
      %v401 = vunpack.c.l.b16 %v259
      %v402 = vunpack.c.l.b16 %v260
      %v403 = vunpack.c.l.b16 %v261
      %v404 = vunpack.c.l.b16 %v262
      %v405 = vunpack.c.l.b16 %v263
      %v406 = vunpack.c.l.b16 %v264
      %v407 = vunpack.c.l.b16 %v265
      %v408 = vunpack.c.l.b16 %v266
      %v409 = vunpack.c.l.b16 %v267
      %v410 = vunpack.c.l.b16 %v268
      %v411 = vunpack.c.l.b16 %v269
      %v412 = vunpack.c.l.b16 %v270
      %v413 = vunpack.c.l.b16 %v271
      %v414 = vunpack.c.l.b16 %v272
      %v415 = vunpack.c.l.b16 %v273
      %v416 = vunpack.c.l.b16 %v274
      %v417 = vunpack.c.l.b16 %v275
      %v418 = vunpack.c.l.b16 %v276
      %v419 = vunpack.c.l.b16 %v277
      %v420 = vunpack.c.l.b16 %v278
      %v421 = vunpack.c.l.b16 %v279
      %v422 = vunpack.c.l.b16 %v280
      %v423 = vunpack.c.l.b16 %v281
      %v424 = vunpack.c.l.b16 %v282
      %v425 = vunpack.c.l.b16 %v283
      %v426 = vunpack.c.l.b16 %v284
      %v427 = vunpack.c.l.b16 %v285
      %v428 = vunpack.c.l.b16 %v286
      %v429 = vunpack.c.l.b16 %v287
      %v430 = vunpack.c.l.b16 %v288
      %v431 = vunpack.c.l.b16 %v289
      %v432 = vunpack.c.l.b16 %v290
      %v433 = vpack.c.b16 %v370, %v369
      %v434 = vpack.c.b16 %v372, %v371
      %v435 = vpack.c.b16 %v374, %v373
      %v436 = vpack.c.b16 %v376, %v375
      %v437 = vpack.c.b16 %v378, %v377
      %v438 = vpack.c.b16 %v380, %v379
      %v439 = vpack.c.b16 %v382, %v381
      %v440 = vpack.c.b16 %v384, %v383
      %v441 = vpack.c.b16 %v386, %v385
      %v442 = vpack.c.b16 %v388, %v387
      %v443 = vpack.c.b16 %v390, %v389
      %v444 = vpack.c.b16 %v392, %v391
      %v445 = vpack.c.b16 %v394, %v393
      %v446 = vpack.c.b16 %v396, %v395
      %v447 = vpack.c.b16 %v398, %v397
      %v448 = vpack.c.b16 %v400, %v399
      %v449 = vpack.c.b16 %v402, %v401
      %v450 = vpack.c.b16 %v404, %v403
      %v451 = vpack.c.b16 %v406, %v405
      %v452 = vpack.c.b16 %v408, %v407
      %v453 = vpack.c.b16 %v410, %v409
      %v454 = vpack.c.b16 %v412, %v411
      %v455 = vpack.c.b16 %v414, %v413
      %v456 = vpack.c.b16 %v416, %v415
      %v457 = vpack.c.b16 %v418, %v417
      %v458 = vpack.c.b16 %v420, %v419
      %v459 = vpack.c.b16 %v422, %v421
      %v460 = vpack.c.b16 %v424, %v423
      %v461 = vpack.c.b16 %v426, %v425
      %v462 = vpack.c.b16 %v428, %v427
      %v463 = vpack.c.b16 %v430, %v429
      %v464 = vpack.c.b16 %v432, %v431
      %497 = vmatprep.subr.bf16.mxu0 0
      %498 = vmatpush1.bf16.msra.mxu0 %v433
      %499 = vmatprep.subr.bf16.mxu0 0
      %500 = vmatpush1.bf16.msra.mxu0 %v434
      %501 = vmatprep.subr.bf16.mxu0 0
      %502 = vmatpush1.bf16.msra.mxu0 %v435
      %503 = vmatprep.subr.bf16.mxu0 0
      %504 = vmatpush1.bf16.msra.mxu0 %v436
      %505 = vmatprep.subr.bf16.mxu0 0
      %506 = vmatpush1.bf16.msra.mxu0 %v437
      %507 = vmatprep.subr.bf16.mxu0 0
      %508 = vmatpush1.bf16.msra.mxu0 %v438
      %509 = vmatprep.subr.bf16.mxu0 0
      %510 = vmatpush1.bf16.msra.mxu0 %v439
      %511 = vmatprep.subr.bf16.mxu0 0
      %512 = vmatpush1.bf16.msra.mxu0 %v440
      %513 = vmatprep.subr.bf16.mxu0 0
      %514 = vmatpush1.bf16.msra.mxu0 %v441
      %515 = vmatprep.subr.bf16.mxu0 0
      %516 = vmatpush1.bf16.msra.mxu0 %v442
      %517 = vmatprep.subr.bf16.mxu0 0
      %518 = vmatpush1.bf16.msra.mxu0 %v443
      %519 = vmatprep.subr.bf16.mxu0 0
      %520 = vmatpush1.bf16.msra.mxu0 %v444
      %521 = vmatprep.subr.bf16.mxu0 0
      %522 = vmatpush1.bf16.msra.mxu0 %v445
      %523 = vmatprep.subr.bf16.mxu0 0
      %524 = vmatpush1.bf16.msra.mxu0 %v446
      %525 = vmatprep.subr.bf16.mxu0 0
      %526 = vmatpush1.bf16.msra.mxu0 %v447
      %527 = vmatprep.subr.bf16.mxu0 0
      %528 = vmatpush1.bf16.msra.mxu0 %v448
      %529 = vmatprep.mubr.bf16.mxu0 %v298
      %530 = vmatmul.mubr.bf16.gmra.mrb[0].mxu0 %v297
      %v531 = vpop.f32.mrb[0].mxu0
      %v532 = vadd.f32 0.0, %v531
      %v533 = vpop.f32.mrb[0].mxu0
      %v534 = vpop.f32.mrb[0].mxu0
      %v535 = vpop.f32.mrb[0].mxu0
      %536 = vdwg.mxu0
      %537 = vmatprep.subr.bf16.mxu0 0
      %538 = vmatpush1.bf16.msra.mxu0 %v449
      %539 = vmatprep.subr.bf16.mxu0 0
      %540 = vmatpush1.bf16.msra.mxu0 %v450
      %541 = vmatprep.subr.bf16.mxu0 0
      %542 = vmatpush1.bf16.msra.mxu0 %v451
      %543 = vmatprep.subr.bf16.mxu0 0
      %544 = vmatpush1.bf16.msra.mxu0 %v452
      %545 = vmatprep.subr.bf16.mxu0 0
      %546 = vmatpush1.bf16.msra.mxu0 %v453
      %547 = vmatprep.subr.bf16.mxu0 0
      %548 = vmatpush1.bf16.msra.mxu0 %v454
      %549 = vmatprep.subr.bf16.mxu0 0
      %550 = vmatpush1.bf16.msra.mxu0 %v455
      %551 = vmatprep.subr.bf16.mxu0 0
      %552 = vmatpush1.bf16.msra.mxu0 %v456
      %553 = vmatprep.subr.bf16.mxu0 0
      %554 = vmatpush1.bf16.msra.mxu0 %v457
      %555 = vmatprep.subr.bf16.mxu0 0
      %556 = vmatpush1.bf16.msra.mxu0 %v458
      %557 = vmatprep.subr.bf16.mxu0 0
      %558 = vmatpush1.bf16.msra.mxu0 %v459
      %559 = vmatprep.subr.bf16.mxu0 0
      %560 = vmatpush1.bf16.msra.mxu0 %v460
      %561 = vmatprep.subr.bf16.mxu0 0
      %562 = vmatpush1.bf16.msra.mxu0 %v461
      %563 = vmatprep.subr.bf16.mxu0 0
      %564 = vmatpush1.bf16.msra.mxu0 %v462
      %565 = vmatprep.subr.bf16.mxu0 0
      %566 = vmatpush1.bf16.msra.mxu0 %v463
      %567 = vmatprep.subr.bf16.mxu0 0
      %568 = vmatpush1.bf16.msra.mxu0 %v464
      %569 = vmatprep.mubr.bf16.mxu0 %v300
      %570 = vmatmul.mubr.bf16.gmra.mrb[0].mxu0 %v299
      %v571 = vpop.f32.mrb[0].mxu0
      %v572 = vadd.f32 %v532, %v571
      %v573 = vpop.f32.mrb[0].mxu0
      %v574 = vpop.f32.mrb[0].mxu0
      %v575 = vpop.f32.mrb[0].mxu0
      %576 = vdwg.mxu0
      %v577 = vadd.f32 %v224, %v572
      %578 = vst [vmem:[#allocation2] sm:$0xff] %v577
      %p579 = scmp.eq.s32.totalorder %s20, 29
      // Predicated region
      $region33: #{model_forward.7} parent=27 // pred_check
        %p580 = pneg %p579
      $region34: #{model_forward.7} parent=27 // pred_check_branch
        %582 = sbr.rel (%p580) target = $region36
      $region35: #{model_forward.7} parent=27 // pred_region
        %v583 = vld [vmem:[#allocation2] sm:$0xff]
        %584 = vst [vmem:[%s217] sm:$0xff] %v583
      $region36: #{model_forward.7} parent=27 // pred_fallthru
        _
      %p585 = scmp.lt.s32.totalorder %s18, 0
      %s586 = scalar_select %p585, %s18, 0
      %p587 = scmp.lt.s32.totalorder %s19, 0
      %s588 = scalar_select %p587, %s19, 0
      %s589 = sadd.s32 %s588, %s586
      %s590 = smul.addr %s589, 8
      %s591 = scalar_lea.vmem %s2, %s590
      // Predicated region
      $region37: #{model_forward.7} parent=27 // pred_check
        %p592 = pneg %p108
      $region38: #{model_forward.7} parent=27 // pred_check_branch
        %594 = sbr.rel (%p592) target = $region40
      $region39: #{model_forward.7} parent=27 // pred_region
        _
      $region40: #{model_forward.7} parent=27 // pred_fallthru
        _
      // Predicated region
      $region41: #{model_forward.7} parent=27 // pred_check
        %p595 = pneg %p108
      $region42: #{model_forward.7} parent=27 // pred_check_branch
        %597 = sbr.rel (%p595) target = $region44
      $region43: #{model_forward.7} parent=27 // pred_region
        %p598 = scmp.lt.s32.totalorder %s18, 0
        %s599 = scalar_select %p598, %s18, 0
        %p600 = scmp.lt.s32.totalorder %s19, 0
        %s601 = scalar_select %p600, %s19, 0
        %s602 = sadd.s32 %s601, %s599
        %s603 = smul.addr %s602, 8
        %s604 = scalar_lea.vmem %s2, %s603
      $region44: #{model_forward.7} parent=27 // pred_fallthru
        _
    $region28: #{model_forward.7} parent=5 // pred_fallthru
      _
    %p605 = scmp.le.s32.totalorder 2, %s8
    // Predicated region
    $region45: #{model_forward.7} parent=5 // pred_check
      %p606 = pneg %p605
    $region46: #{model_forward.7} parent=5 // pred_check_branch
      %608 = sbr.rel (%p606) target = $region48
    $region47: #{model_forward.7} parent=5 // pred_region
      %s609 = ssub.s32 %s8, 2
    $region48: #{model_forward.7} parent=5 // pred_fallthru
      _
  $region6: #{model_forward.7} parent=0 // loop_footer
    %s12 = sadd.s32 1, %s8
  $region7: #{model_forward.7} parent=0 // loop_footer_branch
    %7 = sbr.rel target = $region3
  $region8: #{model_forward.7} parent=0 // loop_exit
    _

</llo_original>
